<compile_context>
chip_gen: v5e
topology: v5e:2x2
jax: 0.10.0
libtpu: 0.0.40
codegen_flags: <defaults>
</compile_context>

<pallas_src>
import functools
import math

import jax
import jax.numpy as jnp
from jax.experimental import pallas as pl
from jax.experimental.pallas import tpu as pltpu


def _round_up(v, m):
    return ((v + m - 1) // m) * m


# ----------------------------------------------------------------------------
# Fused kernel
# ----------------------------------------------------------------------------
def _gcnii_fused_kernel(
    h0_ref,      # (n_pad, c_pad) bf16 resident: h0 = x @ W_in + b_in (pad rows 0)
    adj_ref,     # streamed: (tile_n, n_pad) bf16 tile | resident: raw HBM ref
    w_eff_ref,   # (c_pad, c_pad) bf16, layer-l slice of stacked W_eff
    w_out_ref,   # (c_pad, k_pad) bf16 resident
    b_out_ref,   # (1, k_pad)    f32 resident
    o_ref,       # (tile_n, k_pad) f32 output tile (written on last layer only)
    h_a,         # scratch (n_pad, c_pad) bf16  (ping)
    h_b,         # scratch (n_pad, c_pad) bf16  (pong)
    *extra,      # resident-adj mode only: (adj_vmem, adj_sem)
    tile_n,
    num_classes,
    alpha,
    adj_resident,
):
    l = pl.program_id(0)
    t = pl.program_id(1)
    n_layers = pl.num_programs(0)

    if adj_resident:
        adj_vmem, adj_sem = extra

    # ---- first grid step: seed the pong buffer with h0; pull adj resident ---
    @pl.when(jnp.logical_and(l == 0, t == 0))
    def _init():
        h_b[...] = h0_ref[...]          # layer 0 reads h0 like any other layer
        if adj_resident:
            cp = pltpu.make_async_copy(adj_ref, adj_vmem, adj_sem)
            cp.start()
            cp.wait()

    row0 = pl.multiple_of(t * tile_n, tile_n)

    def layer_step(h_in_ref, h_out_ref):
        # message passing on the (1-alpha)-scaled normalized adjacency
        # (bf16 operands, f32 accumulation on the MXU)
        if adj_resident:
            a_tile = adj_vmem[pl.ds(row0, tile_n), :]
        else:
            a_tile = adj_ref[...]
        agg = jnp.dot(a_tile, h_in_ref[...], preferred_element_type=jnp.float32)

        # initial residual: alpha * h0 (single VPU multiply per element)
        h0_tile = h0_ref[pl.ds(row0, tile_n), :].astype(jnp.float32)
        support = agg + alpha * h0_tile

        # identity mapping folded into W_eff = (1-beta) I + beta W (bf16)
        out = jnp.dot(support.astype(jnp.bfloat16), w_eff_ref[...],
                      preferred_element_type=jnp.float32)

        # ELU (overflow-safe negative branch, VPU select)
        act = jnp.where(out > 0.0, out, jnp.exp(jnp.minimum(out, 0.0)) - 1.0)
        h_out_ref[pl.ds(row0, tile_n), :] = act.astype(jnp.bfloat16)

        # fused classifier + log_softmax on the last layer only
        @pl.when(l == n_layers - 1)
        def _classify():
            z = (jnp.dot(act.astype(jnp.bfloat16), w_out_ref[...],
                         preferred_element_type=jnp.float32)
                 + b_out_ref[...])
            col = jax.lax.broadcasted_iota(jnp.int32, z.shape, 1)
            z = jnp.where(col < num_classes, z, -1e30)   # mask padded classes
            m = jnp.max(z, axis=-1, keepdims=True)
            lse = m + jnp.log(jnp.sum(jnp.exp(z - m), axis=-1, keepdims=True))
            o_ref[...] = z - lse

    # ping-pong so later row tiles of a layer still read the previous layer's
    # h: even layers read pong(h_b) / write ping(h_a), odd layers the reverse.
    @pl.when(l % 2 == 0)
    def _even():
        layer_step(h_b, h_a)

    @pl.when(l % 2 == 1)
    def _odd():
        layer_step(h_a, h_b)


# ----------------------------------------------------------------------------
# Wrapper: pad, prefold, pick adjacency residency, launch one pallas_call
# ----------------------------------------------------------------------------
def gcnii_forward_pallas(
    x, adj, w_in, b_in, conv_ws, w_out, b_out, alpha, theta,
    *, tile_n=256, adj_resident=None,
):
    n, f = x.shape
    c = w_in.shape[1]
    k = w_out.shape[1]
    n_layers = len(conv_ws)
    assert n_layers >= 1
    assert tile_n % 16 == 0, "tile_n must be a multiple of 16 (bf16 sublanes)"

    f32 = jnp.float32
    bf16 = jnp.bfloat16
    n_pad = _round_up(n, tile_n)
    c_pad = _round_up(c, 128)
    k_pad = _round_up(k, 128)
    num_tiles = n_pad // tile_n

    # ---- input projection hoisted out of the kernel (cheap one-time XLA) ----
    h0 = x.astype(f32) @ w_in.astype(f32) + b_in.astype(f32)[None, :]
    # padded rows/cols are exactly zero -> padded h/act rows stay zero in-kernel
    h0_p = jnp.zeros((n_pad, c_pad), bf16).at[:n, :c].set(h0.astype(bf16))

    # (1 - alpha) folded into the normalized adjacency; bf16 halves HBM bytes.
    adj_p = (
        jnp.zeros((n_pad, n_pad), f32)
        .at[:n, :n].set((1.0 - float(alpha)) * adj.astype(f32))
        .astype(bf16)
    )

    # GCN2Conv identity map: (1-b) S + b (S @ W)  ==  S @ ((1-b) I + b W)
    eye = jnp.zeros((c_pad, c_pad), f32).at[:c, :c].set(jnp.eye(c, dtype=f32))
    w_eff = []
    for i, w in enumerate(conv_ws):
        beta = math.log(float(theta) / (i + 1) + 1.0)
        w_p = jnp.zeros((c_pad, c_pad), f32).at[:c, :c].set(w.astype(f32))
        w_eff.append((1.0 - beta) * eye + beta * w_p)
    w_eff = jnp.stack(w_eff).astype(bf16)                       # (L, c_pad, c_pad)

    w_out_p = (jnp.zeros((c_pad, k_pad), f32)
               .at[:c, :k].set(w_out.astype(f32)).astype(bf16))
    b_out_p = jnp.zeros((1, k_pad), f32).at[0, :k].set(b_out.astype(f32))

    # ---- VMEM budgeting against the actual device capacity ------------------
    try:
        vmem_cap = int(pltpu.get_tpu_info().vmem_capacity_bytes)
    except Exception:
        vmem_cap = 64 * 2 ** 20          # conservative (v7x per-TC) fallback
    vmem_budget = vmem_cap - 8 * 2 ** 20

    fixed_bytes = (
        2 * n_pad * c_pad * 2            # h0 resident input (double-buffered)
        + 2 * c_pad * c_pad * 2          # W_eff layer slice (double-buffered)
        + 2 * c_pad * k_pad * 2          # W_out resident
        + 2 * 8 * k_pad * 4              # b_out (sublane-padded)
        + 2 * n_pad * c_pad * 2          # h ping-pong scratch
        + 2 * tile_n * k_pad * 4         # output tile
    )
    adj_res_bytes = n_pad * n_pad * 2            # single-buffered VMEM scratch
    adj_stream_bytes = 2 * tile_n * n_pad * 2    # double-buffered row tiles

    if adj_resident is None:
        adj_resident = (fixed_bytes + adj_res_bytes) <= vmem_budget
    adj_resident = bool(adj_resident)

    total_est = fixed_bytes + (adj_res_bytes if adj_resident else adj_stream_bytes)
    vmem_limit = int(min(max(2 * total_est, 32 * 2 ** 20), vmem_cap - 2 * 2 ** 20))

    # ---- specs ---------------------------------------------------------------
    if adj_resident:
        adj_spec = pl.BlockSpec(memory_space=pl.ANY)   # raw HBM ref, manual DMA
        extra_scratch = [pltpu.VMEM((n_pad, n_pad), bf16),
                         pltpu.SemaphoreType.DMA(())]
    else:
        adj_spec = pl.BlockSpec((tile_n, n_pad), lambda l, t: (t, 0))
        extra_scratch = []

    def out_index_map(l, t):
        # Non-final layers collapse onto block (0,0): no wasted HBM writebacks.
        # Final layer maps (t, 0); its writes are the only data reaching HBM.
        return (jnp.where(l == n_layers - 1, t, 0), 0)

    kernel = functools.partial(
        _gcnii_fused_kernel,
        tile_n=tile_n, num_classes=k, alpha=float(alpha),
        adj_resident=adj_resident,
    )

    flops = (
        n_layers * (2 * n_pad * n_pad * c_pad + 2 * n_pad * c_pad * c_pad)
        + 2 * n_pad * c_pad * k_pad
    )
    transcendentals = n_layers * n_pad * c_pad + n_pad * k_pad
    bytes_accessed = (
        (1 if adj_resident else n_layers) * n_pad * n_pad * 2   # adjacency
        + n_pad * c_pad * 2                                     # h0
        + (n_layers * c_pad * c_pad + c_pad * k_pad) * 2        # weights
        + k_pad * 4
        + n_pad * k_pad * 4                                     # output
    )

    out_pad = pl.pallas_call(
        kernel,
        out_shape=jax.ShapeDtypeStruct((n_pad, k_pad), f32),
        grid=(n_layers, num_tiles),
        in_specs=[
            pl.BlockSpec((n_pad, c_pad), lambda l, t: (0, 0)),            # h0
            adj_spec,                                                      # adj
            pl.BlockSpec((None, c_pad, c_pad), lambda l, t: (l, 0, 0)),   # W_eff[l]
            pl.BlockSpec((c_pad, k_pad), lambda l, t: (0, 0)),            # W_out
            pl.BlockSpec((1, k_pad), lambda l, t: (0, 0)),                # b_out
        ],
        out_specs=pl.BlockSpec((tile_n, k_pad), out_index_map),
        scratch_shapes=[
            pltpu.VMEM((n_pad, c_pad), bf16),    # h ping
            pltpu.VMEM((n_pad, c_pad), bf16),    # h pong
        ] + extra_scratch,
        compiler_params=pltpu.CompilerParams(
            # Layer axis is sequential; every row tile reads the FULL previous-
            # layer h held in private scratch, so the row axis must not be
            # split across TensorCores either -> both "arbitrary".
            dimension_semantics=("arbitrary", "arbitrary"),
            vmem_limit_bytes=vmem_limit,
        ),
        cost_estimate=pl.CostEstimate(
            flops=int(flops),
            transcendentals=int(transcendentals),
            bytes_accessed=int(bytes_accessed),
        ),
    )(h0_p, adj_p, w_eff, w_out_p, b_out_p)

    return out_pad[:n, :k]


# ----------------------------------------------------------------------------
# Plain-JAX glue + f32 reference
# ----------------------------------------------------------------------------
def build_norm_adj(edge_index, num_nodes):
    # Dense D^-1/2 (A + I) D^-1/2, undirected with self-loops (gcn_norm style).
    src, dst = edge_index
    a = jnp.zeros((num_nodes, num_nodes), jnp.float32)
    a = a.at[src, dst].set(1.0)
    a = jnp.maximum(a, a.T)
    a = a + jnp.eye(num_nodes, dtype=jnp.float32)
    deg = a.sum(axis=1)
    dinv = jnp.where(deg > 0, 1.0 / jnp.sqrt(deg), 0.0)
    return dinv[:, None] * a * dinv[None, :]


def gcnii_reference(x, adj, w_in, b_in, conv_ws, w_out, b_out, alpha, theta):
    h = x @ w_in + b_in
    h0 = h
    for i, w in enumerate(conv_ws):
        beta = math.log(theta / (i + 1) + 1.0)
        support = (1.0 - alpha) * (adj @ h) + alpha * h0
        out = (1.0 - beta) * support + beta * (support @ w)
        h = jnp.where(out > 0, out, jnp.expm1(jnp.minimum(out, 0.0)))
    z = h @ w_out + b_out
    return jax.nn.log_softmax(z, axis=-1)


# ----------------------------------------------------------------------------
# Demo
# ----------------------------------------------------------------------------
if __name__ == "__main__":
    num_nodes = 200
    num_node_features = 16
    hidden_dim = 32
    num_classes = 8
    n_layers = 3
    alpha = 0.1
    theta = 0.5
    num_edges = 800

    key = jax.random.PRNGKey(0)
    keys = jax.random.split(key, 6 + n_layers)

    x = jax.random.normal(keys[0], (num_nodes, num_node_features), jnp.float32)
    src = jax.random.randint(keys[1], (num_edges,), 0, num_nodes)
    dst = jax.random.randint(keys[2], (num_edges,), 0, num_nodes)
    edge_index = jnp.stack([src, dst])

    w_in = 0.1 * jax.random.normal(
        keys[3], (num_node_features, hidden_dim), jnp.float32
    )
    b_in = jnp.zeros((hidden_dim,), jnp.float32)
    w_out = 0.1 * jax.random.normal(keys[4], (hidden_dim, num_classes), jnp.float32)
    b_out = jnp.zeros((num_classes,), jnp.float32)
    conv_ws = [
        0.1 * jax.random.normal(keys[5 + i], (hidden_dim, hidden_dim), jnp.float32)
        for i in range(n_layers)
    ]

    adj = build_norm_adj(edge_index, num_nodes)
    ref = gcnii_reference(x, adj, w_in, b_in, conv_ws, w_out, b_out, alpha, theta)

    # tile_n=128 -> n_pad=256, 2 row tiles x 3 layers: exercises padding,
    # multi-tile streaming and the ping-pong h buffers on this tiny demo graph
    # (production default is tile_n=256+).  Run both adjacency modes:
    #   auto (VMEM-resident A_hat) and forced streaming.
    for force_stream in (False, True):
        out = gcnii_forward_pallas(
            x, adj, w_in, b_in, conv_ws, w_out, b_out, alpha, theta,
            tile_n=128, adj_resident=(False if force_stream else None),
        )
        out = jax.block_until_ready(out)

        assert out.shape == (num_nodes, num_classes)
        assert bool(jnp.all(jnp.isfinite(out)))
        # rows of log_softmax must exp-sum to ~1 (softmax computed in f32)
        assert bool(jnp.allclose(jnp.exp(out).sum(axis=-1), 1.0, atol=1e-3))
        # compare against the pure-JAX f32 reference (bf16 adjacency / h / W
        # introduce small, bounded error)
        assert bool(jnp.max(jnp.abs(out - ref)) < 1e-1)

    print("KERNEL_OK")
</pallas_src>

<mosaic_0001>
module attributes {stable_mosaic.version = 11 : i64} {
  func.func @_gcnii_fused_kernel(%arg0: i32, %arg1: i32, %arg2: memref<256x128xbf16, #tpu.memory_space<vmem>>, %arg3: memref<256x256xbf16, #tpu.memory_space<any>>, %arg4: memref<1x128x128xbf16, #tpu.memory_space<vmem>>, %arg5: memref<128x128xbf16, #tpu.memory_space<vmem>>, %arg6: memref<1x128xf32, #tpu.memory_space<vmem>>, %arg7: memref<128x128xf32, #tpu.memory_space<vmem>>, %arg8: memref<256x128xbf16, #tpu.memory_space<vmem>>, %arg9: memref<256x128xbf16, #tpu.memory_space<vmem>>, %arg10: memref<256x256xbf16, #tpu.memory_space<vmem>>, %arg11: memref<!tpu.dma_semaphore, #tpu.memory_space<semaphore_mem>>) attributes {dimension_semantics = [#tpu.dimension_semantics<arbitrary>, #tpu.dimension_semantics<arbitrary>], iteration_bounds = array<i64: 3, 2>, scalar_prefetch = 0 : i64, scratch_operands = 4 : i64, tpu.core_type = #tpu.core_type<tc>, window_params = [{pipeline_mode = #tpu.pipeline_mode<synchronous>, transform_indices = @transform_0, window_bounds = array<i64: 256, 128>}, {}, {transform_indices = @transform_2, window_bounds = array<i64: 1, 128, 128>}, {pipeline_mode = #tpu.pipeline_mode<synchronous>, transform_indices = @transform_3, window_bounds = array<i64: 128, 128>}, {pipeline_mode = #tpu.pipeline_mode<synchronous>, transform_indices = @transform_4, window_bounds = array<i64: 1, 128>}, {transform_indices = @transform_5, window_bounds = array<i64: 128, 128>}]} {
    %c0_i32 = arith.constant 0 : i32
    %0 = arith.cmpi eq, %arg0, %c0_i32 : i32
    %c0_i32_0 = arith.constant 0 : i32
    %1 = arith.cmpi eq, %arg1, %c0_i32_0 : i32
    %2 = arith.andi %0, %1 : i1
    %3 = arith.extui %2 : i1 to i32
    %c0_i32_1 = arith.constant 0 : i32
    %4 = arith.cmpi ne, %3, %c0_i32_1 : i32
    scf.if %4 {
      %c0 = arith.constant 0 : index
      %c0_16 = arith.constant 0 : index
      %33 = vector.load %arg2[%c0, %c0_16] : memref<256x128xbf16, #tpu.memory_space<vmem>>, vector<256x128xbf16>
      %c0_17 = arith.constant 0 : index
      %c0_18 = arith.constant 0 : index
      %34 = vector.load %arg9[%c0_17, %c0_18] : memref<256x128xbf16, #tpu.memory_space<vmem>>, vector<256x128xbf16>
      tpu.vector_store %arg9[%c0_17, %c0_18], %33 {strides = array<i32>} : memref<256x128xbf16, #tpu.memory_space<vmem>>, vector<256x128xbf16>,
      tpu.enqueue_dma source(%arg3 : memref<256x256xbf16, #tpu.memory_space<any>>) target(%arg10 : memref<256x256xbf16, #tpu.memory_space<vmem>>) target_semaphore(%arg11 : memref<!tpu.dma_semaphore, #tpu.memory_space<semaphore_mem>>)
      tpu.wait_dma2 semaphore(%arg11 : memref<!tpu.dma_semaphore, #tpu.memory_space<semaphore_mem>>) src(%arg3 : memref<256x256xbf16, #tpu.memory_space<any>>) dst(%arg10 : memref<256x256xbf16, #tpu.memory_space<vmem>>)
    } else {
    }
    %c128_i32 = arith.constant 128 : i32
    %5 = arith.muli %arg1, %c128_i32 : i32
    %6 = tpu.assume_multiple %5, 128 : i32
    %c2_i32 = arith.constant 2 : i32
    %c0_i32_2 = arith.constant 0 : i32
    %7 = arith.cmpi eq, %c2_i32, %c0_i32_2 : i32
    %c1_i32 = arith.constant 1 : i32
    %8 = arith.select %7, %c1_i32, %c2_i32 : i32
    %9 = arith.remsi %arg0, %8 : i32
    %c0_i32_3 = arith.constant 0 : i32
    %10 = arith.cmpi ne, %9, %c0_i32_3 : i32
    %c0_i32_4 = arith.constant 0 : i32
    %11 = arith.cmpi slt, %9, %c0_i32_4 : i32
    %c0_i32_5 = arith.constant 0 : i32
    %12 = arith.cmpi slt, %8, %c0_i32_5 : i32
    %13 = arith.xori %11, %12 : i1
    %14 = arith.andi %13, %10 : i1
    %15 = arith.addi %9, %8 : i32
    %16 = arith.select %14, %15, %9 : i32
    %c0_i32_6 = arith.constant 0 : i32
    %17 = arith.cmpi eq, %16, %c0_i32_6 : i32
    %18 = arith.extui %17 : i1 to i32
    %c0_i32_7 = arith.constant 0 : i32
    %19 = arith.cmpi ne, %18, %c0_i32_7 : i32
    scf.if %19 {
      %33 = arith.index_cast %6 : i32 to index
      %c0 = arith.constant 0 : index
      %34 = vector.load %arg10[%33, %c0] : memref<256x256xbf16, #tpu.memory_space<vmem>>, vector<128x256xbf16>
      %c0_16 = arith.constant 0 : index
      %c0_17 = arith.constant 0 : index
      %35 = vector.load %arg9[%c0_16, %c0_17] : memref<256x128xbf16, #tpu.memory_space<vmem>>, vector<256x128xbf16>
      %cst = arith.constant dense<0.000000e+00> : vector<128x128xf32>
      %36 = tpu.matmul %34, %35, %cst {dimension_numbers = #tpu.dot_dimension_numbers<[1], [0], [0], [1], [0, 0, 1, 1], [], []>} : vector<128x256xbf16>, vector<256x128xbf16>, vector<128x128xf32> -> vector<128x128xf32>
      %37 = arith.index_cast %6 : i32 to index
      %c0_18 = arith.constant 0 : index
      %38 = vector.load %arg2[%37, %c0_18] : memref<256x128xbf16, #tpu.memory_space<vmem>>, vector<128x128xbf16>
      %39 = arith.extf %38 : vector<128x128xbf16> to vector<128x128xf32>
      %cst_19 = arith.constant 1.000000e-01 : f32
      %40 = vector.broadcast %cst_19 : f32 to vector<128x128xf32>
      %41 = arith.mulf %40, %39 : vector<128x128xf32>
      %42 = arith.addf %36, %41 : vector<128x128xf32>
      %43 = arith.truncf %42 : vector<128x128xf32> to vector<128x128xbf16>
      %c0_20 = arith.constant 0 : index
      %c0_21 = arith.constant 0 : index
      %c0_22 = arith.constant 0 : index
      %44 = vector.load %arg4[%c0_20, %c0_21, %c0_22] : memref<1x128x128xbf16, #tpu.memory_space<vmem>>, vector<1x128x128xbf16>
      %45 = vector.shape_cast %44 : vector<1x128x128xbf16> to vector<128x128xbf16>
      %cst_23 = arith.constant dense<0.000000e+00> : vector<128x128xf32>
      %46 = tpu.matmul %43, %45, %cst_23 {dimension_numbers = #tpu.dot_dimension_numbers<[1], [0], [0], [1], [0, 0, 1, 1], [], []>} : vector<128x128xbf16>, vector<128x128xbf16>, vector<128x128xf32> -> vector<128x128xf32>
      %cst_24 = arith.constant 0.000000e+00 : f32
      %47 = vector.broadcast %cst_24 : f32 to vector<128x128xf32>
      %48 = arith.cmpf ogt, %46, %47 : vector<128x128xf32>
      %cst_25 = arith.constant 0.000000e+00 : f32
      %49 = vector.broadcast %cst_25 : f32 to vector<128x128xf32>
      %50 = arith.minimumf %46, %49 : vector<128x128xf32>
      %51 = math.exp %50 : vector<128x128xf32>
      %cst_26 = arith.constant 1.000000e+00 : f32
      %52 = vector.broadcast %cst_26 : f32 to vector<128x128xf32>
      %53 = arith.subf %51, %52 : vector<128x128xf32>
      %54 = arith.select %48, %46, %53 : vector<128x128xi1>, vector<128x128xf32>
      %55 = arith.truncf %54 : vector<128x128xf32> to vector<128x128xbf16>
      %56 = arith.index_cast %6 : i32 to index
      %c0_27 = arith.constant 0 : index
      %57 = vector.load %arg8[%56, %c0_27] : memref<256x128xbf16, #tpu.memory_space<vmem>>, vector<128x128xbf16>
      tpu.vector_store %arg8[%56, %c0_27], %55 {strides = array<i32>} : memref<256x128xbf16, #tpu.memory_space<vmem>>, vector<128x128xbf16>,
      %c2_i32_28 = arith.constant 2 : i32
      %58 = arith.cmpi eq, %arg0, %c2_i32_28 : i32
      %59 = arith.extui %58 : i1 to i32
      %c0_i32_29 = arith.constant 0 : i32
      %60 = arith.cmpi ne, %59, %c0_i32_29 : i32
      scf.if %60 {
        %61 = arith.truncf %54 : vector<128x128xf32> to vector<128x128xbf16>
        %c0_30 = arith.constant 0 : index
        %c0_31 = arith.constant 0 : index
        %62 = vector.load %arg5[%c0_30, %c0_31] : memref<128x128xbf16, #tpu.memory_space<vmem>>, vector<128x128xbf16>
        %cst_32 = arith.constant dense<0.000000e+00> : vector<128x128xf32>
        %63 = tpu.matmul %61, %62, %cst_32 {dimension_numbers = #tpu.dot_dimension_numbers<[1], [0], [0], [1], [0, 0, 1, 1], [], []>} : vector<128x128xbf16>, vector<128x128xbf16>, vector<128x128xf32> -> vector<128x128xf32>
        %c0_33 = arith.constant 0 : index
        %c0_34 = arith.constant 0 : index
        %64 = vector.load %arg6[%c0_33, %c0_34] : memref<1x128xf32, #tpu.memory_space<vmem>>, vector<1x128xf32>
        %65 = vector.broadcast %64 : vector<1x128xf32> to vector<128x128xf32>
        %66 = arith.addf %63, %65 : vector<128x128xf32>
        %67 = tpu.iota {dimensions = array<i32: 1>} : vector<128x128xi32>
        %c8_i32 = arith.constant 8 : i32
        %68 = vector.broadcast %c8_i32 : i32 to vector<128x128xi32>
        %69 = arith.cmpi slt, %67, %68 : vector<128x128xi32>
        %cst_35 = arith.constant -1.000000e+30 : f32
        %70 = vector.broadcast %cst_35 : f32 to vector<128x128xf32>
        %71 = arith.select %69, %66, %70 : vector<128x128xi1>, vector<128x128xf32>
        %cst_36 = arith.constant dense<0xFF800000> : vector<128xf32>
        %72 = vector.multi_reduction <maximumf>, %71, %cst_36 [1] : vector<128x128xf32> to vector<128xf32>
        %73 = vector.shape_cast %72 : vector<128xf32> to vector<128x1xf32>
        %74 = vector.broadcast %73 : vector<128x1xf32> to vector<128x128xf32>
        %75 = arith.subf %71, %74 : vector<128x128xf32>
        %76 = math.exp %75 : vector<128x128xf32>
        %cst_37 = arith.constant dense<0.000000e+00> : vector<128xf32>
        %77 = vector.multi_reduction <add>, %76, %cst_37 [1] : vector<128x128xf32> to vector<128xf32>
        %78 = vector.shape_cast %77 : vector<128xf32> to vector<128x1xf32>
        %79 = math.log %78 : vector<128x1xf32>
        %80 = arith.addf %73, %79 : vector<128x1xf32>
        %81 = vector.broadcast %80 : vector<128x1xf32> to vector<128x128xf32>
        %82 = arith.subf %71, %81 : vector<128x128xf32>
        %c0_38 = arith.constant 0 : index
        %c0_39 = arith.constant 0 : index
        %83 = vector.load %arg7[%c0_38, %c0_39] : memref<128x128xf32, #tpu.memory_space<vmem>>, vector<128x128xf32>
        tpu.vector_store %arg7[%c0_38, %c0_39], %82 {strides = array<i32>} : memref<128x128xf32, #tpu.memory_space<vmem>>, vector<128x128xf32>,
      } else {
      }
    } else {
    }
    %c2_i32_8 = arith.constant 2 : i32
    %c0_i32_9 = arith.constant 0 : i32
    %20 = arith.cmpi eq, %c2_i32_8, %c0_i32_9 : i32
    %c1_i32_10 = arith.constant 1 : i32
    %21 = arith.select %20, %c1_i32_10, %c2_i32_8 : i32
    %22 = arith.remsi %arg0, %21 : i32
    %c0_i32_11 = arith.constant 0 : i32
    %23 = arith.cmpi ne, %22, %c0_i32_11 : i32
    %c0_i32_12 = arith.constant 0 : i32
    %24 = arith.cmpi slt, %22, %c0_i32_12 : i32
    %c0_i32_13 = arith.constant 0 : i32
    %25 = arith.cmpi slt, %21, %c0_i32_13 : i32
    %26 = arith.xori %24, %25 : i1
    %27 = arith.andi %26, %23 : i1
    %28 = arith.addi %22, %21 : i32
    %29 = arith.select %27, %28, %22 : i32
    %c1_i32_14 = arith.constant 1 : i32
    %30 = arith.cmpi eq, %29, %c1_i32_14 : i32
    %31 = arith.extui %30 : i1 to i32
    %c0_i32_15 = arith.constant 0 : i32
    %32 = arith.cmpi ne, %31, %c0_i32_15 : i32
    scf.if %32 {
      %33 = arith.index_cast %6 : i32 to index
      %c0 = arith.constant 0 : index
      %34 = vector.load %arg10[%33, %c0] : memref<256x256xbf16, #tpu.memory_space<vmem>>, vector<128x256xbf16>
      %c0_16 = arith.constant 0 : index
      %c0_17 = arith.constant 0 : index
      %35 = vector.load %arg8[%c0_16, %c0_17] : memref<256x128xbf16, #tpu.memory_space<vmem>>, vector<256x128xbf16>
      %cst = arith.constant dense<0.000000e+00> : vector<128x128xf32>
      %36 = tpu.matmul %34, %35, %cst {dimension_numbers = #tpu.dot_dimension_numbers<[1], [0], [0], [1], [0, 0, 1, 1], [], []>} : vector<128x256xbf16>, vector<256x128xbf16>, vector<128x128xf32> -> vector<128x128xf32>
      %37 = arith.index_cast %6 : i32 to index
      %c0_18 = arith.constant 0 : index
      %38 = vector.load %arg2[%37, %c0_18] : memref<256x128xbf16, #tpu.memory_space<vmem>>, vector<128x128xbf16>
      %39 = arith.extf %38 : vector<128x128xbf16> to vector<128x128xf32>
      %cst_19 = arith.constant 1.000000e-01 : f32
      %40 = vector.broadcast %cst_19 : f32 to vector<128x128xf32>
      %41 = arith.mulf %40, %39 : vector<128x128xf32>
      %42 = arith.addf %36, %41 : vector<128x128xf32>
      %43 = arith.truncf %42 : vector<128x128xf32> to vector<128x128xbf16>
      %c0_20 = arith.constant 0 : index
      %c0_21 = arith.constant 0 : index
      %c0_22 = arith.constant 0 : index
      %44 = vector.load %arg4[%c0_20, %c0_21, %c0_22] : memref<1x128x128xbf16, #tpu.memory_space<vmem>>, vector<1x128x128xbf16>
      %45 = vector.shape_cast %44 : vector<1x128x128xbf16> to vector<128x128xbf16>
      %cst_23 = arith.constant dense<0.000000e+00> : vector<128x128xf32>
      %46 = tpu.matmul %43, %45, %cst_23 {dimension_numbers = #tpu.dot_dimension_numbers<[1], [0], [0], [1], [0, 0, 1, 1], [], []>} : vector<128x128xbf16>, vector<128x128xbf16>, vector<128x128xf32> -> vector<128x128xf32>
      %cst_24 = arith.constant 0.000000e+00 : f32
      %47 = vector.broadcast %cst_24 : f32 to vector<128x128xf32>
      %48 = arith.cmpf ogt, %46, %47 : vector<128x128xf32>
      %cst_25 = arith.constant 0.000000e+00 : f32
      %49 = vector.broadcast %cst_25 : f32 to vector<128x128xf32>
      %50 = arith.minimumf %46, %49 : vector<128x128xf32>
      %51 = math.exp %50 : vector<128x128xf32>
      %cst_26 = arith.constant 1.000000e+00 : f32
      %52 = vector.broadcast %cst_26 : f32 to vector<128x128xf32>
      %53 = arith.subf %51, %52 : vector<128x128xf32>
      %54 = arith.select %48, %46, %53 : vector<128x128xi1>, vector<128x128xf32>
      %55 = arith.truncf %54 : vector<128x128xf32> to vector<128x128xbf16>
      %56 = arith.index_cast %6 : i32 to index
      %c0_27 = arith.constant 0 : index
      %57 = vector.load %arg9[%56, %c0_27] : memref<256x128xbf16, #tpu.memory_space<vmem>>, vector<128x128xbf16>
      tpu.vector_store %arg9[%56, %c0_27], %55 {strides = array<i32>} : memref<256x128xbf16, #tpu.memory_space<vmem>>, vector<128x128xbf16>,
      %c2_i32_28 = arith.constant 2 : i32
      %58 = arith.cmpi eq, %arg0, %c2_i32_28 : i32
      %59 = arith.extui %58 : i1 to i32
      %c0_i32_29 = arith.constant 0 : i32
      %60 = arith.cmpi ne, %59, %c0_i32_29 : i32
      scf.if %60 {
        %61 = arith.truncf %54 : vector<128x128xf32> to vector<128x128xbf16>
        %c0_30 = arith.constant 0 : index
        %c0_31 = arith.constant 0 : index
        %62 = vector.load %arg5[%c0_30, %c0_31] : memref<128x128xbf16, #tpu.memory_space<vmem>>, vector<128x128xbf16>
        %cst_32 = arith.constant dense<0.000000e+00> : vector<128x128xf32>
        %63 = tpu.matmul %61, %62, %cst_32 {dimension_numbers = #tpu.dot_dimension_numbers<[1], [0], [0], [1], [0, 0, 1, 1], [], []>} : vector<128x128xbf16>, vector<128x128xbf16>, vector<128x128xf32> -> vector<128x128xf32>
        %c0_33 = arith.constant 0 : index
        %c0_34 = arith.constant 0 : index
        %64 = vector.load %arg6[%c0_33, %c0_34] : memref<1x128xf32, #tpu.memory_space<vmem>>, vector<1x128xf32>
        %65 = vector.broadcast %64 : vector<1x128xf32> to vector<128x128xf32>
        %66 = arith.addf %63, %65 : vector<128x128xf32>
        %67 = tpu.iota {dimensions = array<i32: 1>} : vector<128x128xi32>
        %c8_i32 = arith.constant 8 : i32
        %68 = vector.broadcast %c8_i32 : i32 to vector<128x128xi32>
        %69 = arith.cmpi slt, %67, %68 : vector<128x128xi32>
        %cst_35 = arith.constant -1.000000e+30 : f32
        %70 = vector.broadcast %cst_35 : f32 to vector<128x128xf32>
        %71 = arith.select %69, %66, %70 : vector<128x128xi1>, vector<128x128xf32>
        %cst_36 = arith.constant dense<0xFF800000> : vector<128xf32>
        %72 = vector.multi_reduction <maximumf>, %71, %cst_36 [1] : vector<128x128xf32> to vector<128xf32>
        %73 = vector.shape_cast %72 : vector<128xf32> to vector<128x1xf32>
        %74 = vector.broadcast %73 : vector<128x1xf32> to vector<128x128xf32>
        %75 = arith.subf %71, %74 : vector<128x128xf32>
        %76 = math.exp %75 : vector<128x128xf32>
        %cst_37 = arith.constant dense<0.000000e+00> : vector<128xf32>
        %77 = vector.multi_reduction <add>, %76, %cst_37 [1] : vector<128x128xf32> to vector<128xf32>
        %78 = vector.shape_cast %77 : vector<128xf32> to vector<128x1xf32>
        %79 = math.log %78 : vector<128x1xf32>
        %80 = arith.addf %73, %79 : vector<128x1xf32>
        %81 = vector.broadcast %80 : vector<128x1xf32> to vector<128x128xf32>
        %82 = arith.subf %71, %81 : vector<128x128xf32>
        %c0_38 = arith.constant 0 : index
        %c0_39 = arith.constant 0 : index
        %83 = vector.load %arg7[%c0_38, %c0_39] : memref<128x128xf32, #tpu.memory_space<vmem>>, vector<128x128xf32>
        tpu.vector_store %arg7[%c0_38, %c0_39], %82 {strides = array<i32>} : memref<128x128xf32, #tpu.memory_space<vmem>>, vector<128x128xf32>,
      } else {
      }
    } else {
    }
    return
  }
  func.func @transform_0(%arg0: i32, %arg1: i32) -> (i32, i32) {
    %c0_i32 = arith.constant 0 : i32
    %c0_i32_0 = arith.constant 0 : i32
    %c0_i32_1 = arith.constant 0 : i32
    return %c0_i32, %c0_i32_0 : i32, i32
  }
  func.func @transform_2(%arg0: i32, %arg1: i32) -> (i32, i32, i32) {
    %c0_i32 = arith.constant 0 : i32
    %c0_i32_0 = arith.constant 0 : i32
    %c0_i32_1 = arith.constant 0 : i32
    return %arg0, %c0_i32, %c0_i32_0 : i32, i32, i32
  }
  func.func @transform_3(%arg0: i32, %arg1: i32) -> (i32, i32) {
    %c0_i32 = arith.constant 0 : i32
    %c0_i32_0 = arith.constant 0 : i32
    %c0_i32_1 = arith.constant 0 : i32
    return %c0_i32, %c0_i32_0 : i32, i32
  }
  func.func @transform_4(%arg0: i32, %arg1: i32) -> (i32, i32) {
    %c0_i32 = arith.constant 0 : i32
    %c0_i32_0 = arith.constant 0 : i32
    %c0_i32_1 = arith.constant 0 : i32
    return %c0_i32, %c0_i32_0 : i32, i32
  }
  func.func @transform_5(%arg0: i32, %arg1: i32) -> (i32, i32) {
    %c2_i32 = arith.constant 2 : i32
    %0 = arith.cmpi eq, %arg0, %c2_i32 : i32
    %c0_i32 = arith.constant 0 : i32
    %1 = arith.select %0, %arg1, %c0_i32 : i32
    %c0_i32_0 = arith.constant 0 : i32
    %c0_i32_1 = arith.constant 0 : i32
    return %1, %c0_i32_0 : i32, i32
  }
}

</mosaic_0001>

<llo_original>
// kernel: tpu_custom_call.1
$region0: #{tpu_custom_call.1}
  #allocation0 [shape = 'u32[]', space=smem, size = 0x4, offset = 0x4, fixed_abs, tag = 'smem constant byte address 0x4 - core index']
  #allocation1 [shape = 'u32[72,128]{1,0:T(1,128)}', space=vmem, size = 0x9000, scoped, tag = 'internal scratch']
  #allocation2 [shape = 'bf16[256,128]{1,0:T(8,128)(2,1)}', space=vmem, size = 0x10000, scoped, tag = 'scratch operand']
  #allocation3 [shape = 'bf16[256,128]{1,0:T(8,128)(2,1)}', space=vmem, size = 0x10000, scoped, tag = 'scratch operand']
  #allocation4 [shape = 'bf16[256,256]{1,0:T(8,128)(2,1)}', space=vmem, size = 0x20000, scoped, tag = 'scratch operand']
  #allocation5 [shape = 's32[1]{0}', space=sflag, size = 0x4, scoped, tag = 'scratch operand']
  #allocation13 [shape = 's32[]', space=sflag, size = 0x4, offset = 0, fixed_abs, tag = 'sflag constant byte address 0x0 - dummy sync flag']
  #allocation14 [shape = 's32[]', space=sflag, size = 0x4, offset = 0, fixed_abs, tag = 'sflag constant byte address 0x0 - dummy sync flag']
  #allocation15 [shape = 'u32[]', space=smem, size = 0x4, offset = 0x44, fixed_abs, tag = 'smem constant byte address 0x44 - assertion arg 0']
  #allocation16 [shape = 'u32[]', space=smem, size = 0x4, offset = 0x48, fixed_abs, tag = 'smem constant byte address 0x48 - assertion arg 1']
  %s0 = inlined_call_operand.hbm [shape: bf16[256,128], index: 0, kind: input, shape index: {}]
  %s1 = inlined_call_operand.hbm [shape: bf16[256,256], index: 1, kind: input, shape index: {}]
  %s2 = inlined_call_operand.hbm [shape: bf16[3,128,128], index: 2, kind: input, shape index: {}]
  %s3 = inlined_call_operand.hbm [shape: bf16[128,128], index: 3, kind: input, shape index: {}]
  %s4 = inlined_call_operand.vmem [shape: f32[1,128], index: 4, kind: input, shape index: {}]
  %s5 = inlined_call_operand.hbm [shape: f32[256,128], index: 5, kind: output, shape index: {}]
  %s6 = sld [smem:[#allocation0]]
  $region85: #{tpu_custom_call.1} parent=0
    _
  %s8 = ssub.s32 1, %s6
  %s9 = scalar_select 0, %s8, %s6
  $region1: #{tpu_custom_call.1} parent=0
    #allocation6 [shape = 'u8[65536]{0}', space=vmem, size = 0x10000, scoped, tag = 'input window, operand 0, single buffered']
    #allocation7 [shape = 's32[2]{0}', space=sflag, size = 0x8, scoped, tag = 'scoped memory for tpu_custom_call.1']
    #allocation8 [shape = 's32[2]{0}', space=sflag, size = 0x8, scoped, tag = 'scoped memory for tpu_custom_call.1']
    #allocation9 [shape = 'u8[65536]{0}', space=vmem, size = 0x10000, scoped, tag = 'input window, operand 2']
    #allocation10 [shape = 's32[2]{0}', space=sflag, size = 0x8, scoped, tag = 'scoped memory for tpu_custom_call.1']
    #allocation11 [shape = 'u8[32768]{0}', space=vmem, size = 0x8000, scoped, tag = 'input window, operand 3, single buffered']
    #allocation12 [shape = 'u8[131072]{0}', space=vmem, size = 0x20000, scoped, tag = 'output window, operand 0']
    %10 = vsyncpa [#allocation7], 0
    %11 = vsyncpa [#allocation10], 0
    %s12 = scalar_lea.sflag [#allocation10], 1
    %13 = vsyncpa %s12, 0
    %14 = vsyncpa [#allocation8], 0
    %s15 = scalar_lea.sflag [#allocation8], 1
    %16 = vsyncpa %s15, 0
    loop: start=0, step=1, limit=8
    $region2: #{tpu_custom_call.1} parent=1 // loop_pre_header
      _
    $region3: #{tpu_custom_call.1} parent=1 // loop_header
      %s18 = sphi 0, %s22
      %p19 = scmp.ge.s32.totalorder %s18, 8
      %s25 = sphi 0, %s37
      %s26 = sphi 0, %s33
      %s27 = sphi 0, %s25
      %s28 = sphi 0, %s26
      %s29 = sphi 0, %s27
      %s30 = sphi 0, %s28
      %s38 = sphi 0, %s38
      %s40 = sphi 0, %s38
      %s41 = sphi 0, %s40
      %s55 = sphi 0, %s41
      %s61 = sphi 0, %s63
      %s64 = sphi 0, %s61
      %s65 = sphi 0, %s64
      %s81 = sphi 0, %s65
      %s85 = sphi 0, %s85
      %s87 = sphi 0, %s85
      %s88 = sphi 0, %s87
      %s102 = sphi 0, %s88
      %s106 = sphi 0, %s106
      %s108 = sphi 0, %s106
      %s109 = sphi 0, %s108
      %s123 = sphi 0, %s109
      %s133 = sphi 0, %s135
      %s136 = sphi 0, %s133
      %s137 = sphi 0, %s136
      %s153 = sphi 0, %s137
    $region4: #{tpu_custom_call.1} parent=1 // loop_header_branch
      %21 = sbr.rel (%p19) target = $region8
    $region5: #{tpu_custom_call.1} parent=1 // loop_body
      %s23 = ssub.s32 %s18, 1
      %s24 = ssub.s32 %s18, 2
      %s31 = sadd.s32 1, %s26
      %p32 = scmp.ge.s32.totalorder %s31, 2
      %s33 = scalar_select %p32, 0, %s31
      %s34 = sadd.s32 1, %s25
      %s35 = scalar_select %p32, %s34, %s25
      %p36 = scmp.ge.s32.totalorder %s35, 3
      %s37 = scalar_select %p36, 0, %s35
      %s39 = sadd.s32 %s38, 1
      %p42 = scmp.eq.s32.totalorder %s18, 5
      %p43 = scmp.ne.s32.totalorder %s38, %s40
      %p44 = scmp.eq.s32.totalorder %s18, 0
      %p45 = por %p43, %p44
      %p46 = scmp.ne.s32.totalorder %s38, %s40
      %p47 = scmp.eq.s32.totalorder %s23, 5
      %p48 = por %p46, %p47
      %p49 = scmp.ne.s32.totalorder %s40, %s41
      %p50 = scmp.eq.s32.totalorder %s23, 0
      %p51 = por %p49, %p50
      %p52 = scmp.ne.s32.totalorder %s40, %s41
      %p53 = scmp.eq.s32.totalorder %s24, 5
      %p54 = por %p52, %p53
      %p56 = scmp.ne.s32.totalorder %s41, %s55
      %p57 = scmp.eq.s32.totalorder %s24, 0
      %p58 = por %p56, %p57
      %s59 = ssub.s32 %s25, %s37
      %p60 = scmp.eq.s32.totalorder %s59, 0
      %s62 = sadd.s32 %s61, 1
      %s63 = scalar_select %p60, %s61, %s62
      %p66 = pneg %p60
      %p67 = scmp.eq.s32.totalorder %s18, 5
      %p68 = por %p66, %p67
      %p69 = scmp.ne.s32.totalorder %s61, %s64
      %p70 = scmp.eq.s32.totalorder %s18, 0
      %p71 = por %p69, %p70
      %p72 = scmp.ne.s32.totalorder %s61, %s64
      %p73 = scmp.eq.s32.totalorder %s23, 5
      %p74 = por %p72, %p73
      %p75 = scmp.ne.s32.totalorder %s64, %s65
      %p76 = scmp.eq.s32.totalorder %s23, 0
      %p77 = por %p75, %p76
      %p78 = scmp.ne.s32.totalorder %s64, %s65
      %p79 = scmp.eq.s32.totalorder %s24, 5
      %p80 = por %p78, %p79
      %p82 = scmp.ne.s32.totalorder %s65, %s81
      %p83 = scmp.eq.s32.totalorder %s24, 0
      %p84 = por %p82, %p83
      %s86 = sadd.s32 %s85, 1
      %p89 = scmp.eq.s32.totalorder %s18, 5
      %p90 = scmp.ne.s32.totalorder %s85, %s87
      %p91 = scmp.eq.s32.totalorder %s18, 0
      %p92 = por %p90, %p91
      %p93 = scmp.ne.s32.totalorder %s85, %s87
      %p94 = scmp.eq.s32.totalorder %s23, 5
      %p95 = por %p93, %p94
      %p96 = scmp.ne.s32.totalorder %s87, %s88
      %p97 = scmp.eq.s32.totalorder %s23, 0
      %p98 = por %p96, %p97
      %p99 = scmp.ne.s32.totalorder %s87, %s88
      %p100 = scmp.eq.s32.totalorder %s24, 5
      %p101 = por %p99, %p100
      %p103 = scmp.ne.s32.totalorder %s88, %s102
      %p104 = scmp.eq.s32.totalorder %s24, 0
      %p105 = por %p103, %p104
      %s107 = sadd.s32 %s106, 1
      %p110 = scmp.eq.s32.totalorder %s18, 5
      %p111 = scmp.ne.s32.totalorder %s106, %s108
      %p112 = scmp.eq.s32.totalorder %s18, 0
      %p113 = por %p111, %p112
      %p114 = scmp.ne.s32.totalorder %s106, %s108
      %p115 = scmp.eq.s32.totalorder %s23, 5
      %p116 = por %p114, %p115
      %p117 = scmp.ne.s32.totalorder %s108, %s109
      %p118 = scmp.eq.s32.totalorder %s23, 0
      %p119 = por %p117, %p118
      %p120 = scmp.ne.s32.totalorder %s108, %s109
      %p121 = scmp.eq.s32.totalorder %s24, 5
      %p122 = por %p120, %p121
      %p124 = scmp.ne.s32.totalorder %s109, %s123
      %p125 = scmp.eq.s32.totalorder %s24, 0
      %p126 = por %p124, %p125
      %p127 = scmp.eq.s32.totalorder %s25, 2
      %s128 = scalar_select %p127, %s26, 0
      %p129 = scmp.eq.s32.totalorder %s37, 2
      %s130 = scalar_select %p129, %s33, 0
      %s131 = ssub.s32 %s128, %s130
      %p132 = scmp.eq.s32.totalorder %s131, 0
      %s134 = sadd.s32 %s133, 1
      %s135 = scalar_select %p132, %s133, %s134
      %p138 = pneg %p132
      %p139 = scmp.eq.s32.totalorder %s18, 5
      %p140 = por %p138, %p139
      %p141 = scmp.ne.s32.totalorder %s133, %s136
      %p142 = scmp.eq.s32.totalorder %s18, 0
      %p143 = por %p141, %p142
      %p144 = scmp.ne.s32.totalorder %s133, %s136
      %p145 = scmp.eq.s32.totalorder %s23, 5
      %p146 = por %p144, %p145
      %p147 = scmp.ne.s32.totalorder %s136, %s137
      %p148 = scmp.eq.s32.totalorder %s23, 0
      %p149 = por %p147, %p148
      %p150 = scmp.ne.s32.totalorder %s136, %s137
      %p151 = scmp.eq.s32.totalorder %s24, 5
      %p152 = por %p150, %p151
      %p154 = scmp.ne.s32.totalorder %s137, %s153
      %p155 = scmp.eq.s32.totalorder %s24, 0
      %p156 = por %p154, %p155
      %p157 = scmp.le.s32.totalorder 1, %s18
      %p158 = scmp.lt.s32.totalorder %s18, 7
      %p159 = pnand %p157, %p158
      %p160 = pneg %p159
      // Predicated region
      $region9: #{tpu_custom_call.1} parent=5 // pred_check
        _
      $region10: #{tpu_custom_call.1} parent=5 // pred_check_branch
        %162 = sbr.rel (%p159) target = $region12
      $region11: #{tpu_custom_call.1} parent=5 // pred_region
        %s163 = ssub.s32 %s18, 1
        // Predicated region
        $region13: #{tpu_custom_call.1} parent=11 // pred_check
          %p164 = pneg %p51
        $region14: #{tpu_custom_call.1} parent=11 // pred_check_branch
          %166 = sbr.rel (%p164) target = $region16
        $region15: #{tpu_custom_call.1} parent=11 // pred_region
          %168 = vsyncadd [#allocation7], 0
          %s169 = sshll.u32 %s0, 4
          %s170 = int_to_ptr.hbm [resolvable:$true] %s169
          %s171 = sshll.u32 [#allocation6], 4
          %s172 = int_to_ptr.vmem [resolvable:$true] %s171
          %177 = dma.hbm_to_vmem [thread:$0]  %s170, 2048, %s172, [#allocation7], 64, 64, 4
        $region16: #{tpu_custom_call.1} parent=11 // pred_fallthru
          _
        // Predicated region
        $region17: #{tpu_custom_call.1} parent=11 // pred_check
          %p178 = pneg %p98
        $region18: #{tpu_custom_call.1} parent=11 // pred_check_branch
          %180 = sbr.rel (%p178) target = $region20
        $region19: #{tpu_custom_call.1} parent=11 // pred_region
          %182 = vsyncadd [#allocation10], 0
          %s183 = sshll.u32 %s3, 4
          %s184 = int_to_ptr.hbm [resolvable:$true] %s183
          %s185 = sshll.u32 [#allocation11], 4
          %s186 = int_to_ptr.vmem [resolvable:$true] %s185
          %191 = dma.hbm_to_vmem [thread:$0]  %s184, 1024, %s186, [#allocation10], 64, 64, 4
        $region20: #{tpu_custom_call.1} parent=11 // pred_fallthru
          _
        // Predicated region
        $region21: #{tpu_custom_call.1} parent=11 // pred_check
          %p192 = pneg %p119
        $region22: #{tpu_custom_call.1} parent=11 // pred_check_branch
          %194 = sbr.rel (%p192) target = $region24
        $region23: #{tpu_custom_call.1} parent=11 // pred_region
          _
        $region24: #{tpu_custom_call.1} parent=11 // pred_fallthru
          _
      $region12: #{tpu_custom_call.1} parent=5 // pred_fallthru
        _
      %p195 = scmp.lt.s32.totalorder %s18, 6
      // Predicated region
      $region25: #{tpu_custom_call.1} parent=5 // pred_check
        %p196 = pneg %p195
      $region26: #{tpu_custom_call.1} parent=5 // pred_check_branch
        %198 = sbr.rel (%p196) target = $region28
      $region27: #{tpu_custom_call.1} parent=5 // pred_region
        // Predicated region
        $region29: #{tpu_custom_call.1} parent=27 // pred_check
          %p199 = pneg %p71
        $region30: #{tpu_custom_call.1} parent=27 // pred_check_branch
          %201 = sbr.rel (%p199) target = $region32
        $region31: #{tpu_custom_call.1} parent=27 // pred_region
          %s202 = sand.u32 %s18, 1
          %s203 = scalar_lea.sflag [#allocation10], %s202
          %s204 = sand.u32 %s61, 1
          %s205 = smul.addr %s204, 64
          %s206 = scalar_lea.vmem [#allocation9], %s205
          %208 = vsyncadd %s203, 0
          %s209 = smul.addr %s25, 16
          %s210 = smul.addr %s209, 4
          %s211 = scalar_lea.hbm %s2, %s210
          %s212 = sshll.u32 %s211, 4
          %s213 = int_to_ptr.hbm [resolvable:$true] %s212
          %s214 = sshll.u32 %s206, 4
          %s215 = int_to_ptr.vmem [resolvable:$true] %s214
          %220 = dma.hbm_to_vmem [thread:$0]  %s213, 1024, %s215, %s203, 64, 64, 4
        $region32: #{tpu_custom_call.1} parent=27 // pred_fallthru
          _
      $region28: #{tpu_custom_call.1} parent=5 // pred_fallthru
        _
      %p221 = scmp.le.s32.totalorder 1, %s18
      %p222 = scmp.lt.s32.totalorder %s18, 7
      %p223 = pnand %p221, %p222
      %p224 = pneg %p223
      // Predicated region
      $region33: #{tpu_custom_call.1} parent=5 // pred_check
        _
      $region34: #{tpu_custom_call.1} parent=5 // pred_check_branch
        %226 = sbr.rel (%p223) target = $region36
      $region35: #{tpu_custom_call.1} parent=5 // pred_region
        %s227 = ssub.s32 %s18, 1
        // Predicated region
        $region37: #{tpu_custom_call.1} parent=35 // pred_check
          %p228 = pneg %p51
        $region38: #{tpu_custom_call.1} parent=35 // pred_check_branch
          %230 = sbr.rel (%p228) target = $region40
        $region39: #{tpu_custom_call.1} parent=35 // pred_region
          %232 = dma.done [#allocation7], 2048
        $region40: #{tpu_custom_call.1} parent=35 // pred_fallthru
          _
        %s233 = sand.u32 %s23, 1
        %s234 = scalar_lea.sflag [#allocation10], %s233
        %s235 = sand.u32 %s64, 1
        %s236 = smul.addr %s235, 64
        %s237 = scalar_lea.vmem [#allocation9], %s236
        // Predicated region
        $region41: #{tpu_custom_call.1} parent=35 // pred_check
          %p238 = pneg %p77
        $region42: #{tpu_custom_call.1} parent=35 // pred_check_branch
          %240 = sbr.rel (%p238) target = $region44
        $region43: #{tpu_custom_call.1} parent=35 // pred_region
          %242 = dma.done %s234, 1024
        $region44: #{tpu_custom_call.1} parent=35 // pred_fallthru
          _
        // Predicated region
        $region45: #{tpu_custom_call.1} parent=35 // pred_check
          %p243 = pneg %p98
        $region46: #{tpu_custom_call.1} parent=35 // pred_check_branch
          %245 = sbr.rel (%p243) target = $region48
        $region47: #{tpu_custom_call.1} parent=35 // pred_region
          %247 = dma.done [#allocation10], 1024
        $region48: #{tpu_custom_call.1} parent=35 // pred_fallthru
          _
        %p248 = pneg %p51
        %p249 = pneg %p48
        %s250 = sand.u32 %s23, 1
        %s251 = scalar_lea.sflag [#allocation10], %s250
        %s252 = sand.u32 %s64, 1
        %s253 = smul.addr %s252, 64
        %s254 = scalar_lea.vmem [#allocation9], %s253
        %p255 = pneg %p77
        %p256 = pneg %p74
        %p257 = pneg %p98
        %p258 = pneg %p95
        %p259 = pneg %p119
        %p260 = pneg %p116
        %p261 = pneg %p149
        %p262 = pneg %p146
        %s263 = sand.u32 %s136, 1
        %s264 = scalar_lea.sflag [#allocation8], %s263
        %s265 = sand.u32 %s136, 1
        %s266 = smul.addr %s265, 128
        %s267 = scalar_lea.vmem [#allocation12], %s266
        %p268 = scmp.eq.s32.totalorder %s27, 2
        %s269 = scalar_select %p268, %s28, 0
        %s270 = smul.u32 16, %s269
        %p271 = scmp.eq.s32.totalorder %s27, 0
        %p272 = scmp.eq.s32.totalorder %s28, 0
        %p273 = pnand %p271, %p272
        %p274 = pneg %p273
        // Predicated region
        $region49: #{tpu_custom_call.1} parent=35 // pred_check
          _
        $region50: #{tpu_custom_call.1} parent=35 // pred_check_branch
          %276 = sbr.rel (%p273) target = $region52
        $region51: #{tpu_custom_call.1} parent=35 // pred_region
          %v277 = vld [vmem:[#allocation6] sm:$0xf]
          %v278 = vld [vmem:[#allocation6 + $0x4] sm:$0xf]
          %v279 = vld [vmem:[#allocation6 + $0x8] sm:$0xf]
          %v280 = vld [vmem:[#allocation6 + $0xc] sm:$0xf]
          %v281 = vld [vmem:[#allocation6 + $0x10] sm:$0xf]
          %v282 = vld [vmem:[#allocation6 + $0x14] sm:$0xf]
          %v283 = vld [vmem:[#allocation6 + $0x18] sm:$0xf]
          %v284 = vld [vmem:[#allocation6 + $0x1c] sm:$0xf]
          %v285 = vld [vmem:[#allocation6 + $0x20] sm:$0xf]
          %v286 = vld [vmem:[#allocation6 + $0x24] sm:$0xf]
          %v287 = vld [vmem:[#allocation6 + $0x28] sm:$0xf]
          %v288 = vld [vmem:[#allocation6 + $0x2c] sm:$0xf]
          %v289 = vld [vmem:[#allocation6 + $0x30] sm:$0xf]
          %v290 = vld [vmem:[#allocation6 + $0x34] sm:$0xf]
          %v291 = vld [vmem:[#allocation6 + $0x38] sm:$0xf]
          %v292 = vld [vmem:[#allocation6 + $0x3c] sm:$0xf]
          %v293 = vld [vmem:[#allocation6 + $0x40] sm:$0xf]
          %v294 = vld [vmem:[#allocation6 + $0x44] sm:$0xf]
          %v295 = vld [vmem:[#allocation6 + $0x48] sm:$0xf]
          %v296 = vld [vmem:[#allocation6 + $0x4c] sm:$0xf]
          %v297 = vld [vmem:[#allocation6 + $0x50] sm:$0xf]
          %v298 = vld [vmem:[#allocation6 + $0x54] sm:$0xf]
          %v299 = vld [vmem:[#allocation6 + $0x58] sm:$0xf]
          %v300 = vld [vmem:[#allocation6 + $0x5c] sm:$0xf]
          %v301 = vld [vmem:[#allocation6 + $0x60] sm:$0xf]
          %v302 = vld [vmem:[#allocation6 + $0x64] sm:$0xf]
          %v303 = vld [vmem:[#allocation6 + $0x68] sm:$0xf]
          %v304 = vld [vmem:[#allocation6 + $0x6c] sm:$0xf]
          %v305 = vld [vmem:[#allocation6 + $0x70] sm:$0xf]
          %v306 = vld [vmem:[#allocation6 + $0x74] sm:$0xf]
          %v307 = vld [vmem:[#allocation6 + $0x78] sm:$0xf]
          %v308 = vld [vmem:[#allocation6 + $0x7c] sm:$0xf]
          %309 = vst [vmem:[#allocation3] sm:$0xf] %v277
          %310 = vst [vmem:[#allocation3 + $0x4] sm:$0xf] %v278
          %311 = vst [vmem:[#allocation3 + $0x8] sm:$0xf] %v279
          %312 = vst [vmem:[#allocation3 + $0xc] sm:$0xf] %v280
          %313 = vst [vmem:[#allocation3 + $0x10] sm:$0xf] %v281
          %314 = vst [vmem:[#allocation3 + $0x14] sm:$0xf] %v282
          %315 = vst [vmem:[#allocation3 + $0x18] sm:$0xf] %v283
          %316 = vst [vmem:[#allocation3 + $0x1c] sm:$0xf] %v284
          %317 = vst [vmem:[#allocation3 + $0x20] sm:$0xf] %v285
          %318 = vst [vmem:[#allocation3 + $0x24] sm:$0xf] %v286
          %319 = vst [vmem:[#allocation3 + $0x28] sm:$0xf] %v287
          %320 = vst [vmem:[#allocation3 + $0x2c] sm:$0xf] %v288
          %321 = vst [vmem:[#allocation3 + $0x30] sm:$0xf] %v289
          %322 = vst [vmem:[#allocation3 + $0x34] sm:$0xf] %v290
          %323 = vst [vmem:[#allocation3 + $0x38] sm:$0xf] %v291
          %324 = vst [vmem:[#allocation3 + $0x3c] sm:$0xf] %v292
          %325 = vst [vmem:[#allocation3 + $0x40] sm:$0xf] %v293
          %326 = vst [vmem:[#allocation3 + $0x44] sm:$0xf] %v294
          %327 = vst [vmem:[#allocation3 + $0x48] sm:$0xf] %v295
          %328 = vst [vmem:[#allocation3 + $0x4c] sm:$0xf] %v296
          %329 = vst [vmem:[#allocation3 + $0x50] sm:$0xf] %v297
          %330 = vst [vmem:[#allocation3 + $0x54] sm:$0xf] %v298
          %331 = vst [vmem:[#allocation3 + $0x58] sm:$0xf] %v299
          %332 = vst [vmem:[#allocation3 + $0x5c] sm:$0xf] %v300
          %333 = vst [vmem:[#allocation3 + $0x60] sm:$0xf] %v301
          %334 = vst [vmem:[#allocation3 + $0x64] sm:$0xf] %v302
          %335 = vst [vmem:[#allocation3 + $0x68] sm:$0xf] %v303
          %336 = vst [vmem:[#allocation3 + $0x6c] sm:$0xf] %v304
          %337 = vst [vmem:[#allocation3 + $0x70] sm:$0xf] %v305
          %338 = vst [vmem:[#allocation3 + $0x74] sm:$0xf] %v306
          %339 = vst [vmem:[#allocation3 + $0x78] sm:$0xf] %v307
          %340 = vst [vmem:[#allocation3 + $0x7c] sm:$0xf] %v308
          // Predicated region
          $region53: #{tpu_custom_call.1} parent=51 // pred_check
            _
          $region54: #{tpu_custom_call.1} parent=51 // pred_check_branch
            %342 = sbr.rel target = $region56
          $region55: #{tpu_custom_call.1} parent=51 // pred_region
            %343 = sst [smem:[#allocation15]] [#allocation14]
            %344 = sst [smem:[#allocation16]] [#allocation13]
          $region56: #{tpu_custom_call.1} parent=51 // pred_fallthru
            _
          %346 = shalt.err (0)
          %s348 = sshll.u32 %s1, 4
          %s349 = int_to_ptr.hbm [resolvable:$true] %s348
          %s350 = sshll.u32 [#allocation4], 4
          %s351 = int_to_ptr.vmem [resolvable:$true] %s350
          %353 = dma.hbm_to_vmem [thread:$0]  %s349, 4096, %s351, [#allocation5]
          %s354 = smul.u32 4, 32
          %s355 = smul.u32 %s354, 2
          %s356 = sshll.u32 %s355, 4
          %357 = dma.done [#allocation5], %s356
        $region52: #{tpu_custom_call.1} parent=35 // pred_fallthru
          _
        %s358 = smul.u32 %s28, 128
        %p359 = scmp.lt.s32.totalorder %s27, 0
        %s360 = ssub.s32 0, %s27
        %s361 = scalar_select %p359, %s360, %s27
        %s362 = sand.u32 %s361, 1
        %s363 = ssub.s32 0, %s362
        %s364 = scalar_select %p359, %s363, %s362
        %p365 = scmp.ne.s32.totalorder %s364, 0
        %p366 = scmp.lt.s32.totalorder %s364, 0
        %p367 = pnand %p366, %p365
        %p368 = pneg %p367
        %s369 = sadd.s32 %s364, 2
        %s370 = scalar_select %p368, %s369, %s364
        %p371 = scmp.eq.s32.totalorder %s370, 0
        // Predicated region
        $region57: #{tpu_custom_call.1} parent=35 // pred_check
          %p372 = pneg %p371
        $region58: #{tpu_custom_call.1} parent=35 // pred_check_branch
          %374 = sbr.rel (%p372) target = $region60
        $region59: #{tpu_custom_call.1} parent=35 // pred_region
          %s375 = sshra.s32 %s358, 3
          %s376 = sand.u32 %s358, 7
          %s377 = smul.u32 %s375, 2
          %s378 = smul.addr %s377, 4
          %s379 = scalar_lea.vmem [#allocation4], %s378
          %v380 = vld [vmem:[%s379] sm:$0xff]
          %v381 = vld [vmem:[%s379 + $0x8] sm:$0xff]
          %v382 = vld [vmem:[%s379 + $0x10] sm:$0xff]
          %v383 = vld [vmem:[%s379 + $0x18] sm:$0xff]
          %v384 = vld [vmem:[%s379 + $0x20] sm:$0xff]
          %v385 = vld [vmem:[%s379 + $0x28] sm:$0xff]
          %v386 = vld [vmem:[%s379 + $0x30] sm:$0xff]
          %v387 = vld [vmem:[%s379 + $0x38] sm:$0xff]
          %v388 = vld [vmem:[%s379 + $0x40] sm:$0xff]
          %v389 = vld [vmem:[%s379 + $0x48] sm:$0xff]
          %v390 = vld [vmem:[%s379 + $0x50] sm:$0xff]
          %v391 = vld [vmem:[%s379 + $0x58] sm:$0xff]
          %v392 = vld [vmem:[%s379 + $0x60] sm:$0xff]
          %v393 = vld [vmem:[%s379 + $0x68] sm:$0xff]
          %v394 = vld [vmem:[%s379 + $0x70] sm:$0xff]
          %v395 = vld [vmem:[%s379 + $0x78] sm:$0xff]
          %v396 = vld [vmem:[#allocation3] sm:$0xf]
          %v397 = vld [vmem:[#allocation3 + $0x4] sm:$0xf]
          %v398 = vld [vmem:[#allocation3 + $0x8] sm:$0xf]
          %v399 = vld [vmem:[#allocation3 + $0xc] sm:$0xf]
          %v400 = vld [vmem:[#allocation3 + $0x10] sm:$0xf]
          %v401 = vld [vmem:[#allocation3 + $0x14] sm:$0xf]
          %v402 = vld [vmem:[#allocation3 + $0x18] sm:$0xf]
          %v403 = vld [vmem:[#allocation3 + $0x1c] sm:$0xf]
          %v404 = vld [vmem:[#allocation3 + $0x20] sm:$0xf]
          %v405 = vld [vmem:[#allocation3 + $0x24] sm:$0xf]
          %v406 = vld [vmem:[#allocation3 + $0x28] sm:$0xf]
          %v407 = vld [vmem:[#allocation3 + $0x2c] sm:$0xf]
          %v408 = vld [vmem:[#allocation3 + $0x30] sm:$0xf]
          %v409 = vld [vmem:[#allocation3 + $0x34] sm:$0xf]
          %v410 = vld [vmem:[#allocation3 + $0x38] sm:$0xf]
          %v411 = vld [vmem:[#allocation3 + $0x3c] sm:$0xf]
          %v412 = vld [vmem:[#allocation3 + $0x40] sm:$0xf]
          %v413 = vld [vmem:[#allocation3 + $0x44] sm:$0xf]
          %v414 = vld [vmem:[#allocation3 + $0x48] sm:$0xf]
          %v415 = vld [vmem:[#allocation3 + $0x4c] sm:$0xf]
          %v416 = vld [vmem:[#allocation3 + $0x50] sm:$0xf]
          %v417 = vld [vmem:[#allocation3 + $0x54] sm:$0xf]
          %v418 = vld [vmem:[#allocation3 + $0x58] sm:$0xf]
          %v419 = vld [vmem:[#allocation3 + $0x5c] sm:$0xf]
          %v420 = vld [vmem:[#allocation3 + $0x60] sm:$0xf]
          %v421 = vld [vmem:[#allocation3 + $0x64] sm:$0xf]
          %v422 = vld [vmem:[#allocation3 + $0x68] sm:$0xf]
          %v423 = vld [vmem:[#allocation3 + $0x6c] sm:$0xf]
          %v424 = vld [vmem:[#allocation3 + $0x70] sm:$0xf]
          %v425 = vld [vmem:[#allocation3 + $0x74] sm:$0xf]
          %v426 = vld [vmem:[#allocation3 + $0x78] sm:$0xf]
          %v427 = vld [vmem:[#allocation3 + $0x7c] sm:$0xf]
          %s428 = smul.addr %s375, 4
          %s429 = scalar_lea.vmem [#allocation6], %s428
          %v430 = vld [vmem:[%s429] sm:$0xf]
          %v431 = vld [vmem:[%s429 + $0x4] sm:$0xf]
          %v432 = vld [vmem:[%s429 + $0x8] sm:$0xf]
          %v433 = vld [vmem:[%s429 + $0xc] sm:$0xf]
          %v434 = vld [vmem:[%s429 + $0x10] sm:$0xf]
          %v435 = vld [vmem:[%s429 + $0x14] sm:$0xf]
          %v436 = vld [vmem:[%s429 + $0x18] sm:$0xf]
          %v437 = vld [vmem:[%s429 + $0x1c] sm:$0xf]
          %v438 = vld [vmem:[%s429 + $0x20] sm:$0xf]
          %v439 = vld [vmem:[%s429 + $0x24] sm:$0xf]
          %v440 = vld [vmem:[%s429 + $0x28] sm:$0xf]
          %v441 = vld [vmem:[%s429 + $0x2c] sm:$0xf]
          %v442 = vld [vmem:[%s429 + $0x30] sm:$0xf]
          %v443 = vld [vmem:[%s429 + $0x34] sm:$0xf]
          %v444 = vld [vmem:[%s429 + $0x38] sm:$0xf]
          %v445 = vld [vmem:[%s429 + $0x3c] sm:$0xf]
          %v446 = vunpack.c.l.bf16 %v430
          %v447 = vunpack.c.l.bf16 %v431
          %v448 = vunpack.c.l.bf16 %v432
          %v449 = vunpack.c.l.bf16 %v433
          %v450 = vunpack.c.l.bf16 %v434
          %v451 = vunpack.c.l.bf16 %v435
          %v452 = vunpack.c.l.bf16 %v436
          %v453 = vunpack.c.l.bf16 %v437
          %v454 = vunpack.c.l.bf16 %v438
          %v455 = vunpack.c.l.bf16 %v439
          %v456 = vunpack.c.l.bf16 %v440
          %v457 = vunpack.c.l.bf16 %v441
          %v458 = vunpack.c.l.bf16 %v442
          %v459 = vunpack.c.l.bf16 %v443
          %v460 = vunpack.c.l.bf16 %v444
          %v461 = vunpack.c.l.bf16 %v445
          %v462 = vmul.f32 %v446, 0.1
          %v463 = vmul.f32 %v447, 0.1
          %v464 = vmul.f32 %v448, 0.1
          %v465 = vmul.f32 %v449, 0.1
          %v466 = vmul.f32 %v450, 0.1
          %v467 = vmul.f32 %v451, 0.1
          %v468 = vmul.f32 %v452, 0.1
          %v469 = vmul.f32 %v453, 0.1
          %v470 = vmul.f32 %v454, 0.1
          %v471 = vmul.f32 %v455, 0.1
          %v472 = vmul.f32 %v456, 0.1
          %v473 = vmul.f32 %v457, 0.1
          %v474 = vmul.f32 %v458, 0.1
          %v475 = vmul.f32 %v459, 0.1
          %v476 = vmul.f32 %v460, 0.1
          %v477 = vmul.f32 %v461, 0.1
          %v494 = vunpack.c.l.b16 %v380
          %v495 = vunpack.c.h.b16 %v380
          %v496 = vunpack.c.l.b16 %v381
          %v497 = vunpack.c.h.b16 %v381
          %v498 = vunpack.c.l.b16 %v382
          %v499 = vunpack.c.h.b16 %v382
          %v500 = vunpack.c.l.b16 %v383
          %v501 = vunpack.c.h.b16 %v383
          %v502 = vunpack.c.l.b16 %v384
          %v503 = vunpack.c.h.b16 %v384
          %v504 = vunpack.c.l.b16 %v385
          %v505 = vunpack.c.h.b16 %v385
          %v506 = vunpack.c.l.b16 %v386
          %v507 = vunpack.c.h.b16 %v386
          %v508 = vunpack.c.l.b16 %v387
          %v509 = vunpack.c.h.b16 %v387
          %v510 = vunpack.c.l.b16 %v388
          %v511 = vunpack.c.h.b16 %v388
          %v512 = vunpack.c.l.b16 %v389
          %v513 = vunpack.c.h.b16 %v389
          %v514 = vunpack.c.l.b16 %v390
          %v515 = vunpack.c.h.b16 %v390
          %v516 = vunpack.c.l.b16 %v391
          %v517 = vunpack.c.h.b16 %v391
          %v518 = vunpack.c.l.b16 %v392
          %v519 = vunpack.c.h.b16 %v392
          %v520 = vunpack.c.l.b16 %v393
          %v521 = vunpack.c.h.b16 %v393
          %v522 = vunpack.c.l.b16 %v394
          %v523 = vunpack.c.h.b16 %v394
          %v524 = vunpack.c.l.b16 %v395
          %v525 = vunpack.c.h.b16 %v395
          %v526 = vpack.c.b16 %v496, %v494
          %v527 = vpack.c.b16 %v497, %v495
          %v528 = vpack.c.b16 %v500, %v498
          %v529 = vpack.c.b16 %v501, %v499
          %v530 = vpack.c.b16 %v504, %v502
          %v531 = vpack.c.b16 %v505, %v503
          %v532 = vpack.c.b16 %v508, %v506
          %v533 = vpack.c.b16 %v509, %v507
          %v534 = vpack.c.b16 %v512, %v510
          %v535 = vpack.c.b16 %v513, %v511
          %v536 = vpack.c.b16 %v516, %v514
          %v537 = vpack.c.b16 %v517, %v515
          %v538 = vpack.c.b16 %v520, %v518
          %v539 = vpack.c.b16 %v521, %v519
          %v540 = vpack.c.b16 %v524, %v522
          %v541 = vpack.c.b16 %v525, %v523
          %v590 = vunpack.c.l.b16 %v396
          %v591 = vunpack.c.l.b16 %v397
          %v592 = vunpack.c.l.b16 %v398
          %v593 = vunpack.c.l.b16 %v399
          %v594 = vunpack.c.l.b16 %v400
          %v595 = vunpack.c.l.b16 %v401
          %v596 = vunpack.c.l.b16 %v402
          %v597 = vunpack.c.l.b16 %v403
          %v598 = vunpack.c.l.b16 %v404
          %v599 = vunpack.c.l.b16 %v405
          %v600 = vunpack.c.l.b16 %v406
          %v601 = vunpack.c.l.b16 %v407
          %v602 = vunpack.c.l.b16 %v408
          %v603 = vunpack.c.l.b16 %v409
          %v604 = vunpack.c.l.b16 %v410
          %v605 = vunpack.c.l.b16 %v411
          %v606 = vunpack.c.l.b16 %v412
          %v607 = vunpack.c.l.b16 %v413
          %v608 = vunpack.c.l.b16 %v414
          %v609 = vunpack.c.l.b16 %v415
          %v610 = vunpack.c.l.b16 %v416
          %v611 = vunpack.c.l.b16 %v417
          %v612 = vunpack.c.l.b16 %v418
          %v613 = vunpack.c.l.b16 %v419
          %v614 = vunpack.c.l.b16 %v420
          %v615 = vunpack.c.l.b16 %v421
          %v616 = vunpack.c.l.b16 %v422
          %v617 = vunpack.c.l.b16 %v423
          %v618 = vunpack.c.l.b16 %v424
          %v619 = vunpack.c.l.b16 %v425
          %v620 = vunpack.c.l.b16 %v426
          %v621 = vunpack.c.l.b16 %v427
          %v622 = vpack.c.b16 %v591, %v590
          %v623 = vpack.c.b16 %v593, %v592
          %v624 = vpack.c.b16 %v595, %v594
          %v625 = vpack.c.b16 %v597, %v596
          %v626 = vpack.c.b16 %v599, %v598
          %v627 = vpack.c.b16 %v601, %v600
          %v628 = vpack.c.b16 %v603, %v602
          %v629 = vpack.c.b16 %v605, %v604
          %v630 = vpack.c.b16 %v607, %v606
          %v631 = vpack.c.b16 %v609, %v608
          %v632 = vpack.c.b16 %v611, %v610
          %v633 = vpack.c.b16 %v613, %v612
          %v634 = vpack.c.b16 %v615, %v614
          %v635 = vpack.c.b16 %v617, %v616
          %v636 = vpack.c.b16 %v619, %v618
          %v637 = vpack.c.b16 %v621, %v620
          %654 = vmatpush.bf16.msra.mxu0 %v629
          %655 = vmatpush.bf16.msra.mxu0 %v628
          %656 = vmatpush.bf16.msra.mxu0 %v627
          %657 = vmatpush.bf16.msra.mxu0 %v626
          %658 = vmatpush.bf16.msra.mxu0 %v625
          %659 = vmatpush.bf16.msra.mxu0 %v624
          %660 = vmatpush.bf16.msra.mxu0 %v623
          %661 = vmatpush.bf16.msra.mxu0 %v622
          %662 = vmatmul.bf16.gmra.mxu0 %v526
          %v663 = vpop.f32.mrf.mxu0
          %v664 = vadd.f32 %v462, %v663
          %v665 = vpop.f32.mrf.mxu0
          %v666 = vadd.f32 %v463, %v665
          %667 = vmatmul.bf16.gmra.mxu0 %v528
          %v668 = vpop.f32.mrf.mxu0
          %v669 = vadd.f32 %v464, %v668
          %v670 = vpop.f32.mrf.mxu0
          %v671 = vadd.f32 %v465, %v670
          %672 = vmatmul.bf16.gmra.mxu0 %v530
          %v673 = vpop.f32.mrf.mxu0
          %v674 = vadd.f32 %v466, %v673
          %v675 = vpop.f32.mrf.mxu0
          %v676 = vadd.f32 %v467, %v675
          %677 = vmatmul.bf16.gmra.mxu0 %v532
          %v678 = vpop.f32.mrf.mxu0
          %v679 = vadd.f32 %v468, %v678
          %v680 = vpop.f32.mrf.mxu0
          %v681 = vadd.f32 %v469, %v680
          %682 = vmatmul.bf16.gmra.mxu0 %v534
          %v683 = vpop.f32.mrf.mxu0
          %v684 = vadd.f32 %v470, %v683
          %v685 = vpop.f32.mrf.mxu0
          %v686 = vadd.f32 %v471, %v685
          %687 = vmatmul.bf16.gmra.mxu0 %v536
          %v688 = vpop.f32.mrf.mxu0
          %v689 = vadd.f32 %v472, %v688
          %v690 = vpop.f32.mrf.mxu0
          %v691 = vadd.f32 %v473, %v690
          %692 = vmatmul.bf16.gmra.mxu0 %v538
          %v693 = vpop.f32.mrf.mxu0
          %v694 = vadd.f32 %v474, %v693
          %v695 = vpop.f32.mrf.mxu0
          %v696 = vadd.f32 %v475, %v695
          %697 = vmatmul.bf16.gmra.mxu0 %v540
          %v698 = vpop.f32.mrf.mxu0
          %v699 = vadd.f32 %v476, %v698
          %v700 = vpop.f32.mrf.mxu0
          %v701 = vadd.f32 %v477, %v700
          %702 = vdwg.mxu0
          %703 = vmatpush.bf16.msra.mxu0 %v637
          %704 = vmatpush.bf16.msra.mxu0 %v636
          %705 = vmatpush.bf16.msra.mxu0 %v635
          %706 = vmatpush.bf16.msra.mxu0 %v634
          %707 = vmatpush.bf16.msra.mxu0 %v633
          %708 = vmatpush.bf16.msra.mxu0 %v632
          %709 = vmatpush.bf16.msra.mxu0 %v631
          %710 = vmatpush.bf16.msra.mxu0 %v630
          %711 = vmatmul.bf16.gmra.mxu0 %v527
          %v712 = vpop.f32.mrf.mxu0
          %v713 = vadd.f32 %v664, %v712
          %v714 = vpop.f32.mrf.mxu0
          %v715 = vadd.f32 %v666, %v714
          %716 = vmatmul.bf16.gmra.mxu0 %v529
          %v717 = vpop.f32.mrf.mxu0
          %v718 = vadd.f32 %v669, %v717
          %v719 = vpop.f32.mrf.mxu0
          %v720 = vadd.f32 %v671, %v719
          %721 = vmatmul.bf16.gmra.mxu0 %v531
          %v722 = vpop.f32.mrf.mxu0
          %v723 = vadd.f32 %v674, %v722
          %v724 = vpop.f32.mrf.mxu0
          %v725 = vadd.f32 %v676, %v724
          %726 = vmatmul.bf16.gmra.mxu0 %v533
          %v727 = vpop.f32.mrf.mxu0
          %v728 = vadd.f32 %v679, %v727
          %v729 = vpop.f32.mrf.mxu0
          %v730 = vadd.f32 %v681, %v729
          %731 = vmatmul.bf16.gmra.mxu0 %v535
          %v732 = vpop.f32.mrf.mxu0
          %v733 = vadd.f32 %v684, %v732
          %v734 = vpop.f32.mrf.mxu0
          %v735 = vadd.f32 %v686, %v734
          %736 = vmatmul.bf16.gmra.mxu0 %v537
          %v737 = vpop.f32.mrf.mxu0
          %v738 = vadd.f32 %v689, %v737
          %v739 = vpop.f32.mrf.mxu0
          %v740 = vadd.f32 %v691, %v739
          %741 = vmatmul.bf16.gmra.mxu0 %v539
          %v742 = vpop.f32.mrf.mxu0
          %v743 = vadd.f32 %v694, %v742
          %v744 = vpop.f32.mrf.mxu0
          %v745 = vadd.f32 %v696, %v744
          %746 = vmatmul.bf16.gmra.mxu0 %v541
          %v747 = vpop.f32.mrf.mxu0
          %v748 = vadd.f32 %v699, %v747
          %v749 = vpop.f32.mrf.mxu0
          %v750 = vadd.f32 %v701, %v749
          %751 = vdwg.mxu0
          %v752 = vpack.c.bf16 %v715, %v713
          %v753 = vpack.c.bf16 %v720, %v718
          %v754 = vpack.c.bf16 %v725, %v723
          %v755 = vpack.c.bf16 %v730, %v728
          %v756 = vpack.c.bf16 %v735, %v733
          %v757 = vpack.c.bf16 %v740, %v738
          %v758 = vpack.c.bf16 %v745, %v743
          %v759 = vpack.c.bf16 %v750, %v748
          %v760 = vld [vmem:[%s237] sm:$0xf]
          %v761 = vld [vmem:[%s237 + $0x4] sm:$0xf]
          %v762 = vld [vmem:[%s237 + $0x8] sm:$0xf]
          %v763 = vld [vmem:[%s237 + $0xc] sm:$0xf]
          %v764 = vld [vmem:[%s237 + $0x10] sm:$0xf]
          %v765 = vld [vmem:[%s237 + $0x14] sm:$0xf]
          %v766 = vld [vmem:[%s237 + $0x18] sm:$0xf]
          %v767 = vld [vmem:[%s237 + $0x1c] sm:$0xf]
          %v768 = vld [vmem:[%s237 + $0x20] sm:$0xf]
          %v769 = vld [vmem:[%s237 + $0x24] sm:$0xf]
          %v770 = vld [vmem:[%s237 + $0x28] sm:$0xf]
          %v771 = vld [vmem:[%s237 + $0x2c] sm:$0xf]
          %v772 = vld [vmem:[%s237 + $0x30] sm:$0xf]
          %v773 = vld [vmem:[%s237 + $0x34] sm:$0xf]
          %v774 = vld [vmem:[%s237 + $0x38] sm:$0xf]
          %v775 = vld [vmem:[%s237 + $0x3c] sm:$0xf]
          %v792 = vunpack.c.l.b16 %v760
          %v793 = vunpack.c.l.b16 %v761
          %v794 = vunpack.c.l.b16 %v762
          %v795 = vunpack.c.l.b16 %v763
          %v796 = vunpack.c.l.b16 %v764
          %v797 = vunpack.c.l.b16 %v765
          %v798 = vunpack.c.l.b16 %v766
          %v799 = vunpack.c.l.b16 %v767
          %v800 = vunpack.c.l.b16 %v768
          %v801 = vunpack.c.l.b16 %v769
          %v802 = vunpack.c.l.b16 %v770
          %v803 = vunpack.c.l.b16 %v771
          %v804 = vunpack.c.l.b16 %v772
          %v805 = vunpack.c.l.b16 %v773
          %v806 = vunpack.c.l.b16 %v774
          %v807 = vunpack.c.l.b16 %v775
          %v808 = vpack.c.b16 %v793, %v792
          %v809 = vpack.c.b16 %v795, %v794
          %v810 = vpack.c.b16 %v797, %v796
          %v811 = vpack.c.b16 %v799, %v798
          %v812 = vpack.c.b16 %v801, %v800
          %v813 = vpack.c.b16 %v803, %v802
          %v814 = vpack.c.b16 %v805, %v804
          %v815 = vpack.c.b16 %v807, %v806
          %824 = vmatpush.bf16.msra.mxu0 %v815
          %825 = vmatpush.bf16.msra.mxu0 %v814
          %826 = vmatpush.bf16.msra.mxu0 %v813
          %827 = vmatpush.bf16.msra.mxu0 %v812
          %828 = vmatpush.bf16.msra.mxu0 %v811
          %829 = vmatpush.bf16.msra.mxu0 %v810
          %830 = vmatpush.bf16.msra.mxu0 %v809
          %831 = vmatpush.bf16.msra.mxu0 %v808
          %832 = vmatmul.bf16.gmra.mxu0 %v752
          %v833 = vpop.f32.mrf.mxu0
          %v834 = vadd.f32 0.0, %v833
          %v835 = vpop.f32.mrf.mxu0
          %v836 = vadd.f32 0.0, %v835
          %837 = vmatmul.bf16.gmra.mxu0 %v753
          %v838 = vpop.f32.mrf.mxu0
          %v839 = vadd.f32 0.0, %v838
          %v840 = vpop.f32.mrf.mxu0
          %v841 = vadd.f32 0.0, %v840
          %842 = vmatmul.bf16.gmra.mxu0 %v754
          %v843 = vpop.f32.mrf.mxu0
          %v844 = vadd.f32 0.0, %v843
          %v845 = vpop.f32.mrf.mxu0
          %v846 = vadd.f32 0.0, %v845
          %847 = vmatmul.bf16.gmra.mxu0 %v755
          %v848 = vpop.f32.mrf.mxu0
          %v849 = vadd.f32 0.0, %v848
          %v850 = vpop.f32.mrf.mxu0
          %v851 = vadd.f32 0.0, %v850
          %852 = vmatmul.bf16.gmra.mxu0 %v756
          %v853 = vpop.f32.mrf.mxu0
          %v854 = vadd.f32 0.0, %v853
          %v855 = vpop.f32.mrf.mxu0
          %v856 = vadd.f32 0.0, %v855
          %857 = vmatmul.bf16.gmra.mxu0 %v757
          %v858 = vpop.f32.mrf.mxu0
          %v859 = vadd.f32 0.0, %v858
          %v860 = vpop.f32.mrf.mxu0
          %v861 = vadd.f32 0.0, %v860
          %862 = vmatmul.bf16.gmra.mxu0 %v758
          %v863 = vpop.f32.mrf.mxu0
          %v864 = vadd.f32 0.0, %v863
          %v865 = vpop.f32.mrf.mxu0
          %v866 = vadd.f32 0.0, %v865
          %867 = vmatmul.bf16.gmra.mxu0 %v759
          %v868 = vpop.f32.mrf.mxu0
          %v869 = vadd.f32 0.0, %v868
          %v870 = vpop.f32.mrf.mxu0
          %v871 = vadd.f32 0.0, %v870
          %872 = vdwg.mxu0
          %vm873 = vcmp.gt.f32.partialorder %v834, 0.0
          %vm874 = vcmp.gt.f32.partialorder %v836, 0.0
          %vm875 = vcmp.gt.f32.partialorder %v839, 0.0
          %vm876 = vcmp.gt.f32.partialorder %v841, 0.0
          %vm877 = vcmp.gt.f32.partialorder %v844, 0.0
          %vm878 = vcmp.gt.f32.partialorder %v846, 0.0
          %vm879 = vcmp.gt.f32.partialorder %v849, 0.0
          %vm880 = vcmp.gt.f32.partialorder %v851, 0.0
          %vm881 = vcmp.gt.f32.partialorder %v854, 0.0
          %vm882 = vcmp.gt.f32.partialorder %v856, 0.0
          %vm883 = vcmp.gt.f32.partialorder %v859, 0.0
          %vm884 = vcmp.gt.f32.partialorder %v861, 0.0
          %vm885 = vcmp.gt.f32.partialorder %v864, 0.0
          %vm886 = vcmp.gt.f32.partialorder %v866, 0.0
          %vm887 = vcmp.gt.f32.partialorder %v869, 0.0
          %vm888 = vcmp.gt.f32.partialorder %v871, 0.0
          %v889 = vmin.f32 %v834, 0.0
          %v890 = vmin.f32 %v836, 0.0
          %v891 = vmin.f32 %v839, 0.0
          %v892 = vmin.f32 %v841, 0.0
          %v893 = vmin.f32 %v844, 0.0
          %v894 = vmin.f32 %v846, 0.0
          %v895 = vmin.f32 %v849, 0.0
          %v896 = vmin.f32 %v851, 0.0
          %v897 = vmin.f32 %v854, 0.0
          %v898 = vmin.f32 %v856, 0.0
          %v899 = vmin.f32 %v859, 0.0
          %v900 = vmin.f32 %v861, 0.0
          %v901 = vmin.f32 %v864, 0.0
          %v902 = vmin.f32 %v866, 0.0
          %v903 = vmin.f32 %v869, 0.0
          %v904 = vmin.f32 %v871, 0.0
          %v905 = vmul.f32 %v889, 1.442695
          %v906 = vpow.pop %v905
          %v907 = vmul.f32 %v890, 1.442695
          %v908 = vpow.pop %v907
          %v909 = vmul.f32 %v891, 1.442695
          %v910 = vpow.pop %v909
          %v911 = vmul.f32 %v892, 1.442695
          %v912 = vpow.pop %v911
          %v913 = vmul.f32 %v893, 1.442695
          %v914 = vpow.pop %v913
          %v915 = vmul.f32 %v894, 1.442695
          %v916 = vpow.pop %v915
          %v917 = vmul.f32 %v895, 1.442695
          %v918 = vpow.pop %v917
          %v919 = vmul.f32 %v896, 1.442695
          %v920 = vpow.pop %v919
          %v921 = vmul.f32 %v897, 1.442695
          %v922 = vpow.pop %v921
          %v923 = vmul.f32 %v898, 1.442695
          %v924 = vpow.pop %v923
          %v925 = vmul.f32 %v899, 1.442695
          %v926 = vpow.pop %v925
          %v927 = vmul.f32 %v900, 1.442695
          %v928 = vpow.pop %v927
          %v929 = vmul.f32 %v901, 1.442695
          %v930 = vpow.pop %v929
          %v931 = vmul.f32 %v902, 1.442695
          %v932 = vpow.pop %v931
          %v933 = vmul.f32 %v903, 1.442695
          %v934 = vpow.pop %v933
          %v935 = vmul.f32 %v904, 1.442695
          %v936 = vpow.pop %v935
          %v937 = vsub.f32 %v906, 1.0
          %v938 = vsub.f32 %v908, 1.0
          %v939 = vsub.f32 %v910, 1.0
          %v940 = vsub.f32 %v912, 1.0
          %v941 = vsub.f32 %v914, 1.0
          %v942 = vsub.f32 %v916, 1.0
          %v943 = vsub.f32 %v918, 1.0
          %v944 = vsub.f32 %v920, 1.0
          %v945 = vsub.f32 %v922, 1.0
          %v946 = vsub.f32 %v924, 1.0
          %v947 = vsub.f32 %v926, 1.0
          %v948 = vsub.f32 %v928, 1.0
          %v949 = vsub.f32 %v930, 1.0
          %v950 = vsub.f32 %v932, 1.0
          %v951 = vsub.f32 %v934, 1.0
          %v952 = vsub.f32 %v936, 1.0
          %v953 = vsel %vm873, %v834, %v937
          %v954 = vsel %vm874, %v836, %v938
          %v955 = vsel %vm875, %v839, %v939
          %v956 = vsel %vm876, %v841, %v940
          %v957 = vsel %vm877, %v844, %v941
          %v958 = vsel %vm878, %v846, %v942
          %v959 = vsel %vm879, %v849, %v943
          %v960 = vsel %vm880, %v851, %v944
          %v961 = vsel %vm881, %v854, %v945
          %v962 = vsel %vm882, %v856, %v946
          %v963 = vsel %vm883, %v859, %v947
          %v964 = vsel %vm884, %v861, %v948
          %v965 = vsel %vm885, %v864, %v949
          %v966 = vsel %vm886, %v866, %v950
          %v967 = vsel %vm887, %v869, %v951
          %v968 = vsel %vm888, %v871, %v952
          %v969 = vpack.c.bf16 %v953, %v953
          %v970 = vpack.c.bf16 %v954, %v954
          %v971 = vpack.c.bf16 %v955, %v955
          %v972 = vpack.c.bf16 %v956, %v956
          %v973 = vpack.c.bf16 %v957, %v957
          %v974 = vpack.c.bf16 %v958, %v958
          %v975 = vpack.c.bf16 %v959, %v959
          %v976 = vpack.c.bf16 %v960, %v960
          %v977 = vpack.c.bf16 %v961, %v961
          %v978 = vpack.c.bf16 %v962, %v962
          %v979 = vpack.c.bf16 %v963, %v963
          %v980 = vpack.c.bf16 %v964, %v964
          %v981 = vpack.c.bf16 %v965, %v965
          %v982 = vpack.c.bf16 %v966, %v966
          %v983 = vpack.c.bf16 %v967, %v967
          %v984 = vpack.c.bf16 %v968, %v968
          %s985 = smul.addr %s375, 4
          %s986 = scalar_lea.vmem [#allocation2], %s985
          %987 = vst [vmem:[%s986] sm:$0xf] %v969
          %988 = vst [vmem:[%s986 + $0x4] sm:$0xf] %v970
          %989 = vst [vmem:[%s986 + $0x8] sm:$0xf] %v971
          %990 = vst [vmem:[%s986 + $0xc] sm:$0xf] %v972
          %991 = vst [vmem:[%s986 + $0x10] sm:$0xf] %v973
          %992 = vst [vmem:[%s986 + $0x14] sm:$0xf] %v974
          %993 = vst [vmem:[%s986 + $0x18] sm:$0xf] %v975
          %994 = vst [vmem:[%s986 + $0x1c] sm:$0xf] %v976
          %995 = vst [vmem:[%s986 + $0x20] sm:$0xf] %v977
          %996 = vst [vmem:[%s986 + $0x24] sm:$0xf] %v978
          %997 = vst [vmem:[%s986 + $0x28] sm:$0xf] %v979
          %998 = vst [vmem:[%s986 + $0x2c] sm:$0xf] %v980
          %999 = vst [vmem:[%s986 + $0x30] sm:$0xf] %v981
          %1000 = vst [vmem:[%s986 + $0x34] sm:$0xf] %v982
          %1001 = vst [vmem:[%s986 + $0x38] sm:$0xf] %v983
          %1002 = vst [vmem:[%s986 + $0x3c] sm:$0xf] %v984
          %p1003 = scmp.eq.s32.totalorder %s27, 2
          // Predicated region
          $region61: #{tpu_custom_call.1} parent=59 // pred_check
            %p1004 = pneg %p1003
          $region62: #{tpu_custom_call.1} parent=59 // pred_check_branch
            %1006 = sbr.rel (%p1004) target = $region64
          $region63: #{tpu_custom_call.1} parent=59 // pred_region
            %v1007 = vld [vmem:[#allocation11] sm:$0xf]
            %v1008 = vld [vmem:[#allocation11 + $0x4] sm:$0xf]
            %v1009 = vld [vmem:[#allocation11 + $0x8] sm:$0xf]
            %v1010 = vld [vmem:[#allocation11 + $0xc] sm:$0xf]
            %v1011 = vld [vmem:[#allocation11 + $0x10] sm:$0xf]
            %v1012 = vld [vmem:[#allocation11 + $0x14] sm:$0xf]
            %v1013 = vld [vmem:[#allocation11 + $0x18] sm:$0xf]
            %v1014 = vld [vmem:[#allocation11 + $0x1c] sm:$0xf]
            %v1015 = vld [vmem:[#allocation11 + $0x20] sm:$0xf]
            %v1016 = vld [vmem:[#allocation11 + $0x24] sm:$0xf]
            %v1017 = vld [vmem:[#allocation11 + $0x28] sm:$0xf]
            %v1018 = vld [vmem:[#allocation11 + $0x2c] sm:$0xf]
            %v1019 = vld [vmem:[#allocation11 + $0x30] sm:$0xf]
            %v1020 = vld [vmem:[#allocation11 + $0x34] sm:$0xf]
            %v1021 = vld [vmem:[#allocation11 + $0x38] sm:$0xf]
            %v1022 = vld [vmem:[#allocation11 + $0x3c] sm:$0xf]
            %v1023 = vld [vmem:[%s4] sm:$0x1]
            %v1025 = vperm.slane %v1023, 0
            %v1043 = vunpack.c.l.b16 %v969
            %v1044 = vunpack.c.l.b16 %v970
            %v1045 = vunpack.c.l.b16 %v971
            %v1046 = vunpack.c.l.b16 %v972
            %v1047 = vunpack.c.l.b16 %v973
            %v1048 = vunpack.c.l.b16 %v974
            %v1049 = vunpack.c.l.b16 %v975
            %v1050 = vunpack.c.l.b16 %v976
            %v1051 = vunpack.c.l.b16 %v977
            %v1052 = vunpack.c.l.b16 %v978
            %v1053 = vunpack.c.l.b16 %v979
            %v1054 = vunpack.c.l.b16 %v980
            %v1055 = vunpack.c.l.b16 %v981
            %v1056 = vunpack.c.l.b16 %v982
            %v1057 = vunpack.c.l.b16 %v983
            %v1058 = vunpack.c.l.b16 %v984
            %v1059 = vpack.c.b16 %v1044, %v1043
            %v1060 = vpack.c.b16 %v1046, %v1045
            %v1061 = vpack.c.b16 %v1048, %v1047
            %v1062 = vpack.c.b16 %v1050, %v1049
            %v1063 = vpack.c.b16 %v1052, %v1051
            %v1064 = vpack.c.b16 %v1054, %v1053
            %v1065 = vpack.c.b16 %v1056, %v1055
            %v1066 = vpack.c.b16 %v1058, %v1057
            %v1091 = vunpack.c.l.b16 %v1007
            %v1092 = vunpack.c.l.b16 %v1008
            %v1093 = vunpack.c.l.b16 %v1009
            %v1094 = vunpack.c.l.b16 %v1010
            %v1095 = vunpack.c.l.b16 %v1011
            %v1096 = vunpack.c.l.b16 %v1012
            %v1097 = vunpack.c.l.b16 %v1013
            %v1098 = vunpack.c.l.b16 %v1014
            %v1099 = vunpack.c.l.b16 %v1015
            %v1100 = vunpack.c.l.b16 %v1016
            %v1101 = vunpack.c.l.b16 %v1017
            %v1102 = vunpack.c.l.b16 %v1018
            %v1103 = vunpack.c.l.b16 %v1019
            %v1104 = vunpack.c.l.b16 %v1020
            %v1105 = vunpack.c.l.b16 %v1021
            %v1106 = vunpack.c.l.b16 %v1022
            %v1107 = vpack.c.b16 %v1092, %v1091
            %v1108 = vpack.c.b16 %v1094, %v1093
            %v1109 = vpack.c.b16 %v1096, %v1095
            %v1110 = vpack.c.b16 %v1098, %v1097
            %v1111 = vpack.c.b16 %v1100, %v1099
            %v1112 = vpack.c.b16 %v1102, %v1101
            %v1113 = vpack.c.b16 %v1104, %v1103
            %v1114 = vpack.c.b16 %v1106, %v1105
            %1123 = vmatpush.bf16.msra.mxu0 %v1114
            %1124 = vmatpush.bf16.msra.mxu0 %v1113
            %1125 = vmatpush.bf16.msra.mxu0 %v1112
            %1126 = vmatpush.bf16.msra.mxu0 %v1111
            %1127 = vmatpush.bf16.msra.mxu0 %v1110
            %1128 = vmatpush.bf16.msra.mxu0 %v1109
            %1129 = vmatpush.bf16.msra.mxu0 %v1108
            %1130 = vmatpush.bf16.msra.mxu0 %v1107
            %1131 = vmatmul.bf16.gmra.mxu0 %v1059
            %v1132 = vpop.f32.mrf.mxu0
            %v1133 = vadd.f32 %v1025, %v1132
            %v1134 = vpop.f32.mrf.mxu0
            %v1135 = vadd.f32 %v1025, %v1134
            %1136 = vmatmul.bf16.gmra.mxu0 %v1060
            %v1137 = vpop.f32.mrf.mxu0
            %v1138 = vadd.f32 %v1025, %v1137
            %v1139 = vpop.f32.mrf.mxu0
            %v1140 = vadd.f32 %v1025, %v1139
            %1141 = vmatmul.bf16.gmra.mxu0 %v1061
            %v1142 = vpop.f32.mrf.mxu0
            %v1143 = vadd.f32 %v1025, %v1142
            %v1144 = vpop.f32.mrf.mxu0
            %v1145 = vadd.f32 %v1025, %v1144
            %1146 = vmatmul.bf16.gmra.mxu0 %v1062
            %v1147 = vpop.f32.mrf.mxu0
            %v1148 = vadd.f32 %v1025, %v1147
            %v1149 = vpop.f32.mrf.mxu0
            %v1150 = vadd.f32 %v1025, %v1149
            %1151 = vmatmul.bf16.gmra.mxu0 %v1063
            %v1152 = vpop.f32.mrf.mxu0
            %v1153 = vadd.f32 %v1025, %v1152
            %v1154 = vpop.f32.mrf.mxu0
            %v1155 = vadd.f32 %v1025, %v1154
            %1156 = vmatmul.bf16.gmra.mxu0 %v1064
            %v1157 = vpop.f32.mrf.mxu0
            %v1158 = vadd.f32 %v1025, %v1157
            %v1159 = vpop.f32.mrf.mxu0
            %v1160 = vadd.f32 %v1025, %v1159
            %1161 = vmatmul.bf16.gmra.mxu0 %v1065
            %v1162 = vpop.f32.mrf.mxu0
            %v1163 = vadd.f32 %v1025, %v1162
            %v1164 = vpop.f32.mrf.mxu0
            %v1165 = vadd.f32 %v1025, %v1164
            %1166 = vmatmul.bf16.gmra.mxu0 %v1066
            %v1167 = vpop.f32.mrf.mxu0
            %v1168 = vadd.f32 %v1025, %v1167
            %v1169 = vpop.f32.mrf.mxu0
            %v1170 = vadd.f32 %v1025, %v1169
            %1171 = vdwg.mxu0
            %v1172 = vlaneseq
            %v1173 = vand.u32 %v1172, 127
            %vm1174 = vcmp.lt.s32.totalorder %v1173, 8
            %v1175 = vsel %vm1174, %v1133, -1e+30
            %v1176 = vsel %vm1174, %v1135, -1e+30
            %v1177 = vsel %vm1174, %v1138, -1e+30
            %v1178 = vsel %vm1174, %v1140, -1e+30
            %v1179 = vsel %vm1174, %v1143, -1e+30
            %v1180 = vsel %vm1174, %v1145, -1e+30
            %v1181 = vsel %vm1174, %v1148, -1e+30
            %v1182 = vsel %vm1174, %v1150, -1e+30
            %v1183 = vsel %vm1174, %v1153, -1e+30
            %v1184 = vsel %vm1174, %v1155, -1e+30
            %v1185 = vsel %vm1174, %v1158, -1e+30
            %v1186 = vsel %vm1174, %v1160, -1e+30
            %v1187 = vsel %vm1174, %v1163, -1e+30
            %v1188 = vsel %vm1174, %v1165, -1e+30
            %v1189 = vsel %vm1174, %v1168, -1e+30
            %v1190 = vsel %vm1174, %v1170, -1e+30
            %1191 = vmax.xlane.f32.xlu0 %v1175
            %v1192 = vpop.xlane.xlu0 %1191
            %1193 = vmax.xlane.f32.xlu0 %v1176
            %v1194 = vpop.xlane.xlu0 %1193
            %1195 = vmax.xlane.f32.xlu0 %v1177
            %v1196 = vpop.xlane.xlu0 %1195
            %1197 = vmax.xlane.f32.xlu0 %v1178
            %v1198 = vpop.xlane.xlu0 %1197
            %1199 = vmax.xlane.f32.xlu0 %v1179
            %v1200 = vpop.xlane.xlu0 %1199
            %1201 = vmax.xlane.f32.xlu0 %v1180
            %v1202 = vpop.xlane.xlu0 %1201
            %1203 = vmax.xlane.f32.xlu0 %v1181
            %v1204 = vpop.xlane.xlu0 %1203
            %1205 = vmax.xlane.f32.xlu0 %v1182
            %v1206 = vpop.xlane.xlu0 %1205
            %1207 = vmax.xlane.f32.xlu0 %v1183
            %v1208 = vpop.xlane.xlu0 %1207
            %1209 = vmax.xlane.f32.xlu0 %v1184
            %v1210 = vpop.xlane.xlu0 %1209
            %1211 = vmax.xlane.f32.xlu0 %v1185
            %v1212 = vpop.xlane.xlu0 %1211
            %1213 = vmax.xlane.f32.xlu0 %v1186
            %v1214 = vpop.xlane.xlu0 %1213
            %1215 = vmax.xlane.f32.xlu0 %v1187
            %v1216 = vpop.xlane.xlu0 %1215
            %1217 = vmax.xlane.f32.xlu0 %v1188
            %v1218 = vpop.xlane.xlu0 %1217
            %1219 = vmax.xlane.f32.xlu0 %v1189
            %v1220 = vpop.xlane.xlu0 %1219
            %1221 = vmax.xlane.f32.xlu0 %v1190
            %v1222 = vpop.xlane.xlu0 %1221
            %v1223 = vsub.f32 %v1175, %v1192
            %v1224 = vsub.f32 %v1176, %v1194
            %v1225 = vsub.f32 %v1177, %v1196
            %v1226 = vsub.f32 %v1178, %v1198
            %v1227 = vsub.f32 %v1179, %v1200
            %v1228 = vsub.f32 %v1180, %v1202
            %v1229 = vsub.f32 %v1181, %v1204
            %v1230 = vsub.f32 %v1182, %v1206
            %v1231 = vsub.f32 %v1183, %v1208
            %v1232 = vsub.f32 %v1184, %v1210
            %v1233 = vsub.f32 %v1185, %v1212
            %v1234 = vsub.f32 %v1186, %v1214
            %v1235 = vsub.f32 %v1187, %v1216
            %v1236 = vsub.f32 %v1188, %v1218
            %v1237 = vsub.f32 %v1189, %v1220
            %v1238 = vsub.f32 %v1190, %v1222
            %v1239 = vmul.f32 %v1223, 1.442695
            %v1240 = vpow.pop %v1239
            %v1241 = vmul.f32 %v1224, 1.442695
            %v1242 = vpow.pop %v1241
            %v1243 = vmul.f32 %v1225, 1.442695
            %v1244 = vpow.pop %v1243
            %v1245 = vmul.f32 %v1226, 1.442695
            %v1246 = vpow.pop %v1245
            %v1247 = vmul.f32 %v1227, 1.442695
            %v1248 = vpow.pop %v1247
            %v1249 = vmul.f32 %v1228, 1.442695
            %v1250 = vpow.pop %v1249
            %v1251 = vmul.f32 %v1229, 1.442695
            %v1252 = vpow.pop %v1251
            %v1253 = vmul.f32 %v1230, 1.442695
            %v1254 = vpow.pop %v1253
            %v1255 = vmul.f32 %v1231, 1.442695
            %v1256 = vpow.pop %v1255
            %v1257 = vmul.f32 %v1232, 1.442695
            %v1258 = vpow.pop %v1257
            %v1259 = vmul.f32 %v1233, 1.442695
            %v1260 = vpow.pop %v1259
            %v1261 = vmul.f32 %v1234, 1.442695
            %v1262 = vpow.pop %v1261
            %v1263 = vmul.f32 %v1235, 1.442695
            %v1264 = vpow.pop %v1263
            %v1265 = vmul.f32 %v1236, 1.442695
            %v1266 = vpow.pop %v1265
            %v1267 = vmul.f32 %v1237, 1.442695
            %v1268 = vpow.pop %v1267
            %v1269 = vmul.f32 %v1238, 1.442695
            %v1270 = vpow.pop %v1269
            %1271 = vadd.xlane.f32.xlu0 %v1240
            %v1272 = vpop.xlane.xlu0 %1271
            %1273 = vadd.xlane.f32.xlu0 %v1242
            %v1274 = vpop.xlane.xlu0 %1273
            %1275 = vadd.xlane.f32.xlu0 %v1244
            %v1276 = vpop.xlane.xlu0 %1275
            %1277 = vadd.xlane.f32.xlu0 %v1246
            %v1278 = vpop.xlane.xlu0 %1277
            %1279 = vadd.xlane.f32.xlu0 %v1248
            %v1280 = vpop.xlane.xlu0 %1279
            %1281 = vadd.xlane.f32.xlu0 %v1250
            %v1282 = vpop.xlane.xlu0 %1281
            %1283 = vadd.xlane.f32.xlu0 %v1252
            %v1284 = vpop.xlane.xlu0 %1283
            %1285 = vadd.xlane.f32.xlu0 %v1254
            %v1286 = vpop.xlane.xlu0 %1285
            %1287 = vadd.xlane.f32.xlu0 %v1256
            %v1288 = vpop.xlane.xlu0 %1287
            %1289 = vadd.xlane.f32.xlu0 %v1258
            %v1290 = vpop.xlane.xlu0 %1289
            %1291 = vadd.xlane.f32.xlu0 %v1260
            %v1292 = vpop.xlane.xlu0 %1291
            %1293 = vadd.xlane.f32.xlu0 %v1262
            %v1294 = vpop.xlane.xlu0 %1293
            %1295 = vadd.xlane.f32.xlu0 %v1264
            %v1296 = vpop.xlane.xlu0 %1295
            %1297 = vadd.xlane.f32.xlu0 %v1266
            %v1298 = vpop.xlane.xlu0 %1297
            %1299 = vadd.xlane.f32.xlu0 %v1268
            %v1300 = vpop.xlane.xlu0 %1299
            %1301 = vadd.xlane.f32.xlu0 %v1270
            %v1302 = vpop.xlane.xlu0 %1301
            %v1303 = vlog2.pop %v1272
            %v1304 = vmul.f32 %v1303, 0.6931472
            %v1305 = vlog2.pop %v1274
            %v1306 = vmul.f32 %v1305, 0.6931472
            %v1307 = vlog2.pop %v1276
            %v1308 = vmul.f32 %v1307, 0.6931472
            %v1309 = vlog2.pop %v1278
            %v1310 = vmul.f32 %v1309, 0.6931472
            %v1311 = vlog2.pop %v1280
            %v1312 = vmul.f32 %v1311, 0.6931472
            %v1313 = vlog2.pop %v1282
            %v1314 = vmul.f32 %v1313, 0.6931472
            %v1315 = vlog2.pop %v1284
            %v1316 = vmul.f32 %v1315, 0.6931472
            %v1317 = vlog2.pop %v1286
            %v1318 = vmul.f32 %v1317, 0.6931472
            %v1319 = vlog2.pop %v1288
            %v1320 = vmul.f32 %v1319, 0.6931472
            %v1321 = vlog2.pop %v1290
            %v1322 = vmul.f32 %v1321, 0.6931472
            %v1323 = vlog2.pop %v1292
            %v1324 = vmul.f32 %v1323, 0.6931472
            %v1325 = vlog2.pop %v1294
            %v1326 = vmul.f32 %v1325, 0.6931472
            %v1327 = vlog2.pop %v1296
            %v1328 = vmul.f32 %v1327, 0.6931472
            %v1329 = vlog2.pop %v1298
            %v1330 = vmul.f32 %v1329, 0.6931472
            %v1331 = vlog2.pop %v1300
            %v1332 = vmul.f32 %v1331, 0.6931472
            %v1333 = vlog2.pop %v1302
            %v1334 = vmul.f32 %v1333, 0.6931472
            %v1335 = vadd.f32 %v1192, %v1304
            %v1336 = vadd.f32 %v1194, %v1306
            %v1337 = vadd.f32 %v1196, %v1308
            %v1338 = vadd.f32 %v1198, %v1310
            %v1339 = vadd.f32 %v1200, %v1312
            %v1340 = vadd.f32 %v1202, %v1314
            %v1341 = vadd.f32 %v1204, %v1316
            %v1342 = vadd.f32 %v1206, %v1318
            %v1343 = vadd.f32 %v1208, %v1320
            %v1344 = vadd.f32 %v1210, %v1322
            %v1345 = vadd.f32 %v1212, %v1324
            %v1346 = vadd.f32 %v1214, %v1326
            %v1347 = vadd.f32 %v1216, %v1328
            %v1348 = vadd.f32 %v1218, %v1330
            %v1349 = vadd.f32 %v1220, %v1332
            %v1350 = vadd.f32 %v1222, %v1334
            %v1351 = vsub.f32 %v1175, %v1335
            %v1352 = vsub.f32 %v1176, %v1336
            %v1353 = vsub.f32 %v1177, %v1337
            %v1354 = vsub.f32 %v1178, %v1338
            %v1355 = vsub.f32 %v1179, %v1339
            %v1356 = vsub.f32 %v1180, %v1340
            %v1357 = vsub.f32 %v1181, %v1341
            %v1358 = vsub.f32 %v1182, %v1342
            %v1359 = vsub.f32 %v1183, %v1343
            %v1360 = vsub.f32 %v1184, %v1344
            %v1361 = vsub.f32 %v1185, %v1345
            %v1362 = vsub.f32 %v1186, %v1346
            %v1363 = vsub.f32 %v1187, %v1347
            %v1364 = vsub.f32 %v1188, %v1348
            %v1365 = vsub.f32 %v1189, %v1349
            %v1366 = vsub.f32 %v1190, %v1350
            %1367 = vst [vmem:[%s267] sm:$0xff] %v1351
            %1368 = vst [vmem:[%s267 + $0x8] sm:$0xff] %v1352
            %1369 = vst [vmem:[%s267 + $0x10] sm:$0xff] %v1353
            %1370 = vst [vmem:[%s267 + $0x18] sm:$0xff] %v1354
            %1371 = vst [vmem:[%s267 + $0x20] sm:$0xff] %v1355
            %1372 = vst [vmem:[%s267 + $0x28] sm:$0xff] %v1356
            %1373 = vst [vmem:[%s267 + $0x30] sm:$0xff] %v1357
            %1374 = vst [vmem:[%s267 + $0x38] sm:$0xff] %v1358
            %1375 = vst [vmem:[%s267 + $0x40] sm:$0xff] %v1359
            %1376 = vst [vmem:[%s267 + $0x48] sm:$0xff] %v1360
            %1377 = vst [vmem:[%s267 + $0x50] sm:$0xff] %v1361
            %1378 = vst [vmem:[%s267 + $0x58] sm:$0xff] %v1362
            %1379 = vst [vmem:[%s267 + $0x60] sm:$0xff] %v1363
            %1380 = vst [vmem:[%s267 + $0x68] sm:$0xff] %v1364
            %1381 = vst [vmem:[%s267 + $0x70] sm:$0xff] %v1365
            %1382 = vst [vmem:[%s267 + $0x78] sm:$0xff] %v1366
          $region64: #{tpu_custom_call.1} parent=59 // pred_fallthru
            _
        $region60: #{tpu_custom_call.1} parent=35 // pred_fallthru
          _
        %p1383 = scmp.eq.s32.totalorder %s370, 1
        // Predicated region
        $region65: #{tpu_custom_call.1} parent=35 // pred_check
          %p1384 = pneg %p1383
        $region66: #{tpu_custom_call.1} parent=35 // pred_check_branch
          %1386 = sbr.rel (%p1384) target = $region68
        $region67: #{tpu_custom_call.1} parent=35 // pred_region
          %s1387 = sshra.s32 %s358, 3
          %s1388 = sand.u32 %s358, 7
          %s1389 = smul.u32 %s1387, 2
          %s1390 = smul.addr %s1389, 4
          %s1391 = scalar_lea.vmem [#allocation4], %s1390
          %v1392 = vld [vmem:[%s1391] sm:$0xff]
          %v1393 = vld [vmem:[%s1391 + $0x8] sm:$0xff]
          %v1394 = vld [vmem:[%s1391 + $0x10] sm:$0xff]
          %v1395 = vld [vmem:[%s1391 + $0x18] sm:$0xff]
          %v1396 = vld [vmem:[%s1391 + $0x20] sm:$0xff]
          %v1397 = vld [vmem:[%s1391 + $0x28] sm:$0xff]
          %v1398 = vld [vmem:[%s1391 + $0x30] sm:$0xff]
          %v1399 = vld [vmem:[%s1391 + $0x38] sm:$0xff]
          %v1400 = vld [vmem:[%s1391 + $0x40] sm:$0xff]
          %v1401 = vld [vmem:[%s1391 + $0x48] sm:$0xff]
          %v1402 = vld [vmem:[%s1391 + $0x50] sm:$0xff]
          %v1403 = vld [vmem:[%s1391 + $0x58] sm:$0xff]
          %v1404 = vld [vmem:[%s1391 + $0x60] sm:$0xff]
          %v1405 = vld [vmem:[%s1391 + $0x68] sm:$0xff]
          %v1406 = vld [vmem:[%s1391 + $0x70] sm:$0xff]
          %v1407 = vld [vmem:[%s1391 + $0x78] sm:$0xff]
          %v1408 = vld [vmem:[#allocation2] sm:$0xf]
          %v1409 = vld [vmem:[#allocation2 + $0x4] sm:$0xf]
          %v1410 = vld [vmem:[#allocation2 + $0x8] sm:$0xf]
          %v1411 = vld [vmem:[#allocation2 + $0xc] sm:$0xf]
          %v1412 = vld [vmem:[#allocation2 + $0x10] sm:$0xf]
          %v1413 = vld [vmem:[#allocation2 + $0x14] sm:$0xf]
          %v1414 = vld [vmem:[#allocation2 + $0x18] sm:$0xf]
          %v1415 = vld [vmem:[#allocation2 + $0x1c] sm:$0xf]
          %v1416 = vld [vmem:[#allocation2 + $0x20] sm:$0xf]
          %v1417 = vld [vmem:[#allocation2 + $0x24] sm:$0xf]
          %v1418 = vld [vmem:[#allocation2 + $0x28] sm:$0xf]
          %v1419 = vld [vmem:[#allocation2 + $0x2c] sm:$0xf]
          %v1420 = vld [vmem:[#allocation2 + $0x30] sm:$0xf]
          %v1421 = vld [vmem:[#allocation2 + $0x34] sm:$0xf]
          %v1422 = vld [vmem:[#allocation2 + $0x38] sm:$0xf]
          %v1423 = vld [vmem:[#allocation2 + $0x3c] sm:$0xf]
          %v1424 = vld [vmem:[#allocation2 + $0x40] sm:$0xf]
          %v1425 = vld [vmem:[#allocation2 + $0x44] sm:$0xf]
          %v1426 = vld [vmem:[#allocation2 + $0x48] sm:$0xf]
          %v1427 = vld [vmem:[#allocation2 + $0x4c] sm:$0xf]
          %v1428 = vld [vmem:[#allocation2 + $0x50] sm:$0xf]
          %v1429 = vld [vmem:[#allocation2 + $0x54] sm:$0xf]
          %v1430 = vld [vmem:[#allocation2 + $0x58] sm:$0xf]
          %v1431 = vld [vmem:[#allocation2 + $0x5c] sm:$0xf]
          %v1432 = vld [vmem:[#allocation2 + $0x60] sm:$0xf]
          %v1433 = vld [vmem:[#allocation2 + $0x64] sm:$0xf]
          %v1434 = vld [vmem:[#allocation2 + $0x68] sm:$0xf]
          %v1435 = vld [vmem:[#allocation2 + $0x6c] sm:$0xf]
          %v1436 = vld [vmem:[#allocation2 + $0x70] sm:$0xf]
          %v1437 = vld [vmem:[#allocation2 + $0x74] sm:$0xf]
          %v1438 = vld [vmem:[#allocation2 + $0x78] sm:$0xf]
          %v1439 = vld [vmem:[#allocation2 + $0x7c] sm:$0xf]
          %s1440 = smul.addr %s1387, 4
          %s1441 = scalar_lea.vmem [#allocation6], %s1440
          %v1442 = vld [vmem:[%s1441] sm:$0xf]
          %v1443 = vld [vmem:[%s1441 + $0x4] sm:$0xf]
          %v1444 = vld [vmem:[%s1441 + $0x8] sm:$0xf]
          %v1445 = vld [vmem:[%s1441 + $0xc] sm:$0xf]
          %v1446 = vld [vmem:[%s1441 + $0x10] sm:$0xf]
          %v1447 = vld [vmem:[%s1441 + $0x14] sm:$0xf]
          %v1448 = vld [vmem:[%s1441 + $0x18] sm:$0xf]
          %v1449 = vld [vmem:[%s1441 + $0x1c] sm:$0xf]
          %v1450 = vld [vmem:[%s1441 + $0x20] sm:$0xf]
          %v1451 = vld [vmem:[%s1441 + $0x24] sm:$0xf]
          %v1452 = vld [vmem:[%s1441 + $0x28] sm:$0xf]
          %v1453 = vld [vmem:[%s1441 + $0x2c] sm:$0xf]
          %v1454 = vld [vmem:[%s1441 + $0x30] sm:$0xf]
          %v1455 = vld [vmem:[%s1441 + $0x34] sm:$0xf]
          %v1456 = vld [vmem:[%s1441 + $0x38] sm:$0xf]
          %v1457 = vld [vmem:[%s1441 + $0x3c] sm:$0xf]
          %v1458 = vunpack.c.l.bf16 %v1442
          %v1459 = vunpack.c.l.bf16 %v1443
          %v1460 = vunpack.c.l.bf16 %v1444
          %v1461 = vunpack.c.l.bf16 %v1445
          %v1462 = vunpack.c.l.bf16 %v1446
          %v1463 = vunpack.c.l.bf16 %v1447
          %v1464 = vunpack.c.l.bf16 %v1448
          %v1465 = vunpack.c.l.bf16 %v1449
          %v1466 = vunpack.c.l.bf16 %v1450
          %v1467 = vunpack.c.l.bf16 %v1451
          %v1468 = vunpack.c.l.bf16 %v1452
          %v1469 = vunpack.c.l.bf16 %v1453
          %v1470 = vunpack.c.l.bf16 %v1454
          %v1471 = vunpack.c.l.bf16 %v1455
          %v1472 = vunpack.c.l.bf16 %v1456
          %v1473 = vunpack.c.l.bf16 %v1457
          %v1474 = vmul.f32 %v1458, 0.1
          %v1475 = vmul.f32 %v1459, 0.1
          %v1476 = vmul.f32 %v1460, 0.1
          %v1477 = vmul.f32 %v1461, 0.1
          %v1478 = vmul.f32 %v1462, 0.1
          %v1479 = vmul.f32 %v1463, 0.1
          %v1480 = vmul.f32 %v1464, 0.1
          %v1481 = vmul.f32 %v1465, 0.1
          %v1482 = vmul.f32 %v1466, 0.1
          %v1483 = vmul.f32 %v1467, 0.1
          %v1484 = vmul.f32 %v1468, 0.1
          %v1485 = vmul.f32 %v1469, 0.1
          %v1486 = vmul.f32 %v1470, 0.1
          %v1487 = vmul.f32 %v1471, 0.1
          %v1488 = vmul.f32 %v1472, 0.1
          %v1489 = vmul.f32 %v1473, 0.1
          %v1506 = vunpack.c.l.b16 %v1392
          %v1507 = vunpack.c.h.b16 %v1392
          %v1508 = vunpack.c.l.b16 %v1393
          %v1509 = vunpack.c.h.b16 %v1393
          %v1510 = vunpack.c.l.b16 %v1394
          %v1511 = vunpack.c.h.b16 %v1394
          %v1512 = vunpack.c.l.b16 %v1395
          %v1513 = vunpack.c.h.b16 %v1395
          %v1514 = vunpack.c.l.b16 %v1396
          %v1515 = vunpack.c.h.b16 %v1396
          %v1516 = vunpack.c.l.b16 %v1397
          %v1517 = vunpack.c.h.b16 %v1397
          %v1518 = vunpack.c.l.b16 %v1398
          %v1519 = vunpack.c.h.b16 %v1398
          %v1520 = vunpack.c.l.b16 %v1399
          %v1521 = vunpack.c.h.b16 %v1399
          %v1522 = vunpack.c.l.b16 %v1400
          %v1523 = vunpack.c.h.b16 %v1400
          %v1524 = vunpack.c.l.b16 %v1401
          %v1525 = vunpack.c.h.b16 %v1401
          %v1526 = vunpack.c.l.b16 %v1402
          %v1527 = vunpack.c.h.b16 %v1402
          %v1528 = vunpack.c.l.b16 %v1403
          %v1529 = vunpack.c.h.b16 %v1403
          %v1530 = vunpack.c.l.b16 %v1404
          %v1531 = vunpack.c.h.b16 %v1404
          %v1532 = vunpack.c.l.b16 %v1405
          %v1533 = vunpack.c.h.b16 %v1405
          %v1534 = vunpack.c.l.b16 %v1406
          %v1535 = vunpack.c.h.b16 %v1406
          %v1536 = vunpack.c.l.b16 %v1407
          %v1537 = vunpack.c.h.b16 %v1407
          %v1538 = vpack.c.b16 %v1508, %v1506
          %v1539 = vpack.c.b16 %v1509, %v1507
          %v1540 = vpack.c.b16 %v1512, %v1510
          %v1541 = vpack.c.b16 %v1513, %v1511
          %v1542 = vpack.c.b16 %v1516, %v1514
          %v1543 = vpack.c.b16 %v1517, %v1515
          %v1544 = vpack.c.b16 %v1520, %v1518
          %v1545 = vpack.c.b16 %v1521, %v1519
          %v1546 = vpack.c.b16 %v1524, %v1522
          %v1547 = vpack.c.b16 %v1525, %v1523
          %v1548 = vpack.c.b16 %v1528, %v1526
          %v1549 = vpack.c.b16 %v1529, %v1527
          %v1550 = vpack.c.b16 %v1532, %v1530
          %v1551 = vpack.c.b16 %v1533, %v1531
          %v1552 = vpack.c.b16 %v1536, %v1534
          %v1553 = vpack.c.b16 %v1537, %v1535
          %v1602 = vunpack.c.l.b16 %v1408
          %v1603 = vunpack.c.l.b16 %v1409
          %v1604 = vunpack.c.l.b16 %v1410
          %v1605 = vunpack.c.l.b16 %v1411
          %v1606 = vunpack.c.l.b16 %v1412
          %v1607 = vunpack.c.l.b16 %v1413
          %v1608 = vunpack.c.l.b16 %v1414
          %v1609 = vunpack.c.l.b16 %v1415
          %v1610 = vunpack.c.l.b16 %v1416
          %v1611 = vunpack.c.l.b16 %v1417
          %v1612 = vunpack.c.l.b16 %v1418
          %v1613 = vunpack.c.l.b16 %v1419
          %v1614 = vunpack.c.l.b16 %v1420
          %v1615 = vunpack.c.l.b16 %v1421
          %v1616 = vunpack.c.l.b16 %v1422
          %v1617 = vunpack.c.l.b16 %v1423
          %v1618 = vunpack.c.l.b16 %v1424
          %v1619 = vunpack.c.l.b16 %v1425
          %v1620 = vunpack.c.l.b16 %v1426
          %v1621 = vunpack.c.l.b16 %v1427
          %v1622 = vunpack.c.l.b16 %v1428
          %v1623 = vunpack.c.l.b16 %v1429
          %v1624 = vunpack.c.l.b16 %v1430
          %v1625 = vunpack.c.l.b16 %v1431
          %v1626 = vunpack.c.l.b16 %v1432
          %v1627 = vunpack.c.l.b16 %v1433
          %v1628 = vunpack.c.l.b16 %v1434
          %v1629 = vunpack.c.l.b16 %v1435
          %v1630 = vunpack.c.l.b16 %v1436
          %v1631 = vunpack.c.l.b16 %v1437
          %v1632 = vunpack.c.l.b16 %v1438
          %v1633 = vunpack.c.l.b16 %v1439
          %v1634 = vpack.c.b16 %v1603, %v1602
          %v1635 = vpack.c.b16 %v1605, %v1604
          %v1636 = vpack.c.b16 %v1607, %v1606
          %v1637 = vpack.c.b16 %v1609, %v1608
          %v1638 = vpack.c.b16 %v1611, %v1610
          %v1639 = vpack.c.b16 %v1613, %v1612
          %v1640 = vpack.c.b16 %v1615, %v1614
          %v1641 = vpack.c.b16 %v1617, %v1616
          %v1642 = vpack.c.b16 %v1619, %v1618
          %v1643 = vpack.c.b16 %v1621, %v1620
          %v1644 = vpack.c.b16 %v1623, %v1622
          %v1645 = vpack.c.b16 %v1625, %v1624
          %v1646 = vpack.c.b16 %v1627, %v1626
          %v1647 = vpack.c.b16 %v1629, %v1628
          %v1648 = vpack.c.b16 %v1631, %v1630
          %v1649 = vpack.c.b16 %v1633, %v1632
          %1666 = vmatpush.bf16.msra.mxu0 %v1641
          %1667 = vmatpush.bf16.msra.mxu0 %v1640
          %1668 = vmatpush.bf16.msra.mxu0 %v1639
          %1669 = vmatpush.bf16.msra.mxu0 %v1638
          %1670 = vmatpush.bf16.msra.mxu0 %v1637
          %1671 = vmatpush.bf16.msra.mxu0 %v1636
          %1672 = vmatpush.bf16.msra.mxu0 %v1635
          %1673 = vmatpush.bf16.msra.mxu0 %v1634
          %1674 = vmatmul.bf16.gmra.mxu0 %v1538
          %v1675 = vpop.f32.mrf.mxu0
          %v1676 = vadd.f32 %v1474, %v1675
          %v1677 = vpop.f32.mrf.mxu0
          %v1678 = vadd.f32 %v1475, %v1677
          %1679 = vmatmul.bf16.gmra.mxu0 %v1540
          %v1680 = vpop.f32.mrf.mxu0
          %v1681 = vadd.f32 %v1476, %v1680
          %v1682 = vpop.f32.mrf.mxu0
          %v1683 = vadd.f32 %v1477, %v1682
          %1684 = vmatmul.bf16.gmra.mxu0 %v1542
          %v1685 = vpop.f32.mrf.mxu0
          %v1686 = vadd.f32 %v1478, %v1685
          %v1687 = vpop.f32.mrf.mxu0
          %v1688 = vadd.f32 %v1479, %v1687
          %1689 = vmatmul.bf16.gmra.mxu0 %v1544
          %v1690 = vpop.f32.mrf.mxu0
          %v1691 = vadd.f32 %v1480, %v1690
          %v1692 = vpop.f32.mrf.mxu0
          %v1693 = vadd.f32 %v1481, %v1692
          %1694 = vmatmul.bf16.gmra.mxu0 %v1546
          %v1695 = vpop.f32.mrf.mxu0
          %v1696 = vadd.f32 %v1482, %v1695
          %v1697 = vpop.f32.mrf.mxu0
          %v1698 = vadd.f32 %v1483, %v1697
          %1699 = vmatmul.bf16.gmra.mxu0 %v1548
          %v1700 = vpop.f32.mrf.mxu0
          %v1701 = vadd.f32 %v1484, %v1700
          %v1702 = vpop.f32.mrf.mxu0
          %v1703 = vadd.f32 %v1485, %v1702
          %1704 = vmatmul.bf16.gmra.mxu0 %v1550
          %v1705 = vpop.f32.mrf.mxu0
          %v1706 = vadd.f32 %v1486, %v1705
          %v1707 = vpop.f32.mrf.mxu0
          %v1708 = vadd.f32 %v1487, %v1707
          %1709 = vmatmul.bf16.gmra.mxu0 %v1552
          %v1710 = vpop.f32.mrf.mxu0
          %v1711 = vadd.f32 %v1488, %v1710
          %v1712 = vpop.f32.mrf.mxu0
          %v1713 = vadd.f32 %v1489, %v1712
          %1714 = vdwg.mxu0
          %1715 = vmatpush.bf16.msra.mxu0 %v1649
          %1716 = vmatpush.bf16.msra.mxu0 %v1648
          %1717 = vmatpush.bf16.msra.mxu0 %v1647
          %1718 = vmatpush.bf16.msra.mxu0 %v1646
          %1719 = vmatpush.bf16.msra.mxu0 %v1645
          %1720 = vmatpush.bf16.msra.mxu0 %v1644
          %1721 = vmatpush.bf16.msra.mxu0 %v1643
          %1722 = vmatpush.bf16.msra.mxu0 %v1642
          %1723 = vmatmul.bf16.gmra.mxu0 %v1539
          %v1724 = vpop.f32.mrf.mxu0
          %v1725 = vadd.f32 %v1676, %v1724
          %v1726 = vpop.f32.mrf.mxu0
          %v1727 = vadd.f32 %v1678, %v1726
          %1728 = vmatmul.bf16.gmra.mxu0 %v1541
          %v1729 = vpop.f32.mrf.mxu0
          %v1730 = vadd.f32 %v1681, %v1729
          %v1731 = vpop.f32.mrf.mxu0
          %v1732 = vadd.f32 %v1683, %v1731
          %1733 = vmatmul.bf16.gmra.mxu0 %v1543
          %v1734 = vpop.f32.mrf.mxu0
          %v1735 = vadd.f32 %v1686, %v1734
          %v1736 = vpop.f32.mrf.mxu0
          %v1737 = vadd.f32 %v1688, %v1736
          %1738 = vmatmul.bf16.gmra.mxu0 %v1545
          %v1739 = vpop.f32.mrf.mxu0
          %v1740 = vadd.f32 %v1691, %v1739
          %v1741 = vpop.f32.mrf.mxu0
          %v1742 = vadd.f32 %v1693, %v1741
          %1743 = vmatmul.bf16.gmra.mxu0 %v1547
          %v1744 = vpop.f32.mrf.mxu0
          %v1745 = vadd.f32 %v1696, %v1744
          %v1746 = vpop.f32.mrf.mxu0
          %v1747 = vadd.f32 %v1698, %v1746
          %1748 = vmatmul.bf16.gmra.mxu0 %v1549
          %v1749 = vpop.f32.mrf.mxu0
          %v1750 = vadd.f32 %v1701, %v1749
          %v1751 = vpop.f32.mrf.mxu0
          %v1752 = vadd.f32 %v1703, %v1751
          %1753 = vmatmul.bf16.gmra.mxu0 %v1551
          %v1754 = vpop.f32.mrf.mxu0
          %v1755 = vadd.f32 %v1706, %v1754
          %v1756 = vpop.f32.mrf.mxu0
          %v1757 = vadd.f32 %v1708, %v1756
          %1758 = vmatmul.bf16.gmra.mxu0 %v1553
          %v1759 = vpop.f32.mrf.mxu0
          %v1760 = vadd.f32 %v1711, %v1759
          %v1761 = vpop.f32.mrf.mxu0
          %v1762 = vadd.f32 %v1713, %v1761
          %1763 = vdwg.mxu0
          %v1764 = vpack.c.bf16 %v1727, %v1725
          %v1765 = vpack.c.bf16 %v1732, %v1730
          %v1766 = vpack.c.bf16 %v1737, %v1735
          %v1767 = vpack.c.bf16 %v1742, %v1740
          %v1768 = vpack.c.bf16 %v1747, %v1745
          %v1769 = vpack.c.bf16 %v1752, %v1750
          %v1770 = vpack.c.bf16 %v1757, %v1755
          %v1771 = vpack.c.bf16 %v1762, %v1760
          %v1772 = vld [vmem:[%s237] sm:$0xf]
          %v1773 = vld [vmem:[%s237 + $0x4] sm:$0xf]
          %v1774 = vld [vmem:[%s237 + $0x8] sm:$0xf]
          %v1775 = vld [vmem:[%s237 + $0xc] sm:$0xf]
          %v1776 = vld [vmem:[%s237 + $0x10] sm:$0xf]
          %v1777 = vld [vmem:[%s237 + $0x14] sm:$0xf]
          %v1778 = vld [vmem:[%s237 + $0x18] sm:$0xf]
          %v1779 = vld [vmem:[%s237 + $0x1c] sm:$0xf]
          %v1780 = vld [vmem:[%s237 + $0x20] sm:$0xf]
          %v1781 = vld [vmem:[%s237 + $0x24] sm:$0xf]
          %v1782 = vld [vmem:[%s237 + $0x28] sm:$0xf]
          %v1783 = vld [vmem:[%s237 + $0x2c] sm:$0xf]
          %v1784 = vld [vmem:[%s237 + $0x30] sm:$0xf]
          %v1785 = vld [vmem:[%s237 + $0x34] sm:$0xf]
          %v1786 = vld [vmem:[%s237 + $0x38] sm:$0xf]
          %v1787 = vld [vmem:[%s237 + $0x3c] sm:$0xf]
          %v1804 = vunpack.c.l.b16 %v1772
          %v1805 = vunpack.c.l.b16 %v1773
          %v1806 = vunpack.c.l.b16 %v1774
          %v1807 = vunpack.c.l.b16 %v1775
          %v1808 = vunpack.c.l.b16 %v1776
          %v1809 = vunpack.c.l.b16 %v1777
          %v1810 = vunpack.c.l.b16 %v1778
          %v1811 = vunpack.c.l.b16 %v1779
          %v1812 = vunpack.c.l.b16 %v1780
          %v1813 = vunpack.c.l.b16 %v1781
          %v1814 = vunpack.c.l.b16 %v1782
          %v1815 = vunpack.c.l.b16 %v1783
          %v1816 = vunpack.c.l.b16 %v1784
          %v1817 = vunpack.c.l.b16 %v1785
          %v1818 = vunpack.c.l.b16 %v1786
          %v1819 = vunpack.c.l.b16 %v1787
          %v1820 = vpack.c.b16 %v1805, %v1804
          %v1821 = vpack.c.b16 %v1807, %v1806
          %v1822 = vpack.c.b16 %v1809, %v1808
          %v1823 = vpack.c.b16 %v1811, %v1810
          %v1824 = vpack.c.b16 %v1813, %v1812
          %v1825 = vpack.c.b16 %v1815, %v1814
          %v1826 = vpack.c.b16 %v1817, %v1816
          %v1827 = vpack.c.b16 %v1819, %v1818
          %1836 = vmatpush.bf16.msra.mxu0 %v1827
          %1837 = vmatpush.bf16.msra.mxu0 %v1826
          %1838 = vmatpush.bf16.msra.mxu0 %v1825
          %1839 = vmatpush.bf16.msra.mxu0 %v1824
          %1840 = vmatpush.bf16.msra.mxu0 %v1823
          %1841 = vmatpush.bf16.msra.mxu0 %v1822
          %1842 = vmatpush.bf16.msra.mxu0 %v1821
          %1843 = vmatpush.bf16.msra.mxu0 %v1820
          %1844 = vmatmul.bf16.gmra.mxu0 %v1764
          %v1845 = vpop.f32.mrf.mxu0
          %v1846 = vadd.f32 0.0, %v1845
          %v1847 = vpop.f32.mrf.mxu0
          %v1848 = vadd.f32 0.0, %v1847
          %1849 = vmatmul.bf16.gmra.mxu0 %v1765
          %v1850 = vpop.f32.mrf.mxu0
          %v1851 = vadd.f32 0.0, %v1850
          %v1852 = vpop.f32.mrf.mxu0
          %v1853 = vadd.f32 0.0, %v1852
          %1854 = vmatmul.bf16.gmra.mxu0 %v1766
          %v1855 = vpop.f32.mrf.mxu0
          %v1856 = vadd.f32 0.0, %v1855
          %v1857 = vpop.f32.mrf.mxu0
          %v1858 = vadd.f32 0.0, %v1857
          %1859 = vmatmul.bf16.gmra.mxu0 %v1767
          %v1860 = vpop.f32.mrf.mxu0
          %v1861 = vadd.f32 0.0, %v1860
          %v1862 = vpop.f32.mrf.mxu0
          %v1863 = vadd.f32 0.0, %v1862
          %1864 = vmatmul.bf16.gmra.mxu0 %v1768
          %v1865 = vpop.f32.mrf.mxu0
          %v1866 = vadd.f32 0.0, %v1865
          %v1867 = vpop.f32.mrf.mxu0
          %v1868 = vadd.f32 0.0, %v1867
          %1869 = vmatmul.bf16.gmra.mxu0 %v1769
          %v1870 = vpop.f32.mrf.mxu0
          %v1871 = vadd.f32 0.0, %v1870
          %v1872 = vpop.f32.mrf.mxu0
          %v1873 = vadd.f32 0.0, %v1872
          %1874 = vmatmul.bf16.gmra.mxu0 %v1770
          %v1875 = vpop.f32.mrf.mxu0
          %v1876 = vadd.f32 0.0, %v1875
          %v1877 = vpop.f32.mrf.mxu0
          %v1878 = vadd.f32 0.0, %v1877
          %1879 = vmatmul.bf16.gmra.mxu0 %v1771
          %v1880 = vpop.f32.mrf.mxu0
          %v1881 = vadd.f32 0.0, %v1880
          %v1882 = vpop.f32.mrf.mxu0
          %v1883 = vadd.f32 0.0, %v1882
          %1884 = vdwg.mxu0
          %vm1885 = vcmp.gt.f32.partialorder %v1846, 0.0
          %vm1886 = vcmp.gt.f32.partialorder %v1848, 0.0
          %vm1887 = vcmp.gt.f32.partialorder %v1851, 0.0
          %vm1888 = vcmp.gt.f32.partialorder %v1853, 0.0
          %vm1889 = vcmp.gt.f32.partialorder %v1856, 0.0
          %vm1890 = vcmp.gt.f32.partialorder %v1858, 0.0
          %vm1891 = vcmp.gt.f32.partialorder %v1861, 0.0
          %vm1892 = vcmp.gt.f32.partialorder %v1863, 0.0
          %vm1893 = vcmp.gt.f32.partialorder %v1866, 0.0
          %vm1894 = vcmp.gt.f32.partialorder %v1868, 0.0
          %vm1895 = vcmp.gt.f32.partialorder %v1871, 0.0
          %vm1896 = vcmp.gt.f32.partialorder %v1873, 0.0
          %vm1897 = vcmp.gt.f32.partialorder %v1876, 0.0
          %vm1898 = vcmp.gt.f32.partialorder %v1878, 0.0
          %vm1899 = vcmp.gt.f32.partialorder %v1881, 0.0
          %vm1900 = vcmp.gt.f32.partialorder %v1883, 0.0
          %v1901 = vmin.f32 %v1846, 0.0
          %v1902 = vmin.f32 %v1848, 0.0
          %v1903 = vmin.f32 %v1851, 0.0
          %v1904 = vmin.f32 %v1853, 0.0
          %v1905 = vmin.f32 %v1856, 0.0
          %v1906 = vmin.f32 %v1858, 0.0
          %v1907 = vmin.f32 %v1861, 0.0
          %v1908 = vmin.f32 %v1863, 0.0
          %v1909 = vmin.f32 %v1866, 0.0
          %v1910 = vmin.f32 %v1868, 0.0
          %v1911 = vmin.f32 %v1871, 0.0
          %v1912 = vmin.f32 %v1873, 0.0
          %v1913 = vmin.f32 %v1876, 0.0
          %v1914 = vmin.f32 %v1878, 0.0
          %v1915 = vmin.f32 %v1881, 0.0
          %v1916 = vmin.f32 %v1883, 0.0
          %v1917 = vmul.f32 %v1901, 1.442695
          %v1918 = vpow.pop %v1917
          %v1919 = vmul.f32 %v1902, 1.442695
          %v1920 = vpow.pop %v1919
          %v1921 = vmul.f32 %v1903, 1.442695
          %v1922 = vpow.pop %v1921
          %v1923 = vmul.f32 %v1904, 1.442695
          %v1924 = vpow.pop %v1923
          %v1925 = vmul.f32 %v1905, 1.442695
          %v1926 = vpow.pop %v1925
          %v1927 = vmul.f32 %v1906, 1.442695
          %v1928 = vpow.pop %v1927
          %v1929 = vmul.f32 %v1907, 1.442695
          %v1930 = vpow.pop %v1929
          %v1931 = vmul.f32 %v1908, 1.442695
          %v1932 = vpow.pop %v1931
          %v1933 = vmul.f32 %v1909, 1.442695
          %v1934 = vpow.pop %v1933
          %v1935 = vmul.f32 %v1910, 1.442695
          %v1936 = vpow.pop %v1935
          %v1937 = vmul.f32 %v1911, 1.442695
          %v1938 = vpow.pop %v1937
          %v1939 = vmul.f32 %v1912, 1.442695
          %v1940 = vpow.pop %v1939
          %v1941 = vmul.f32 %v1913, 1.442695
          %v1942 = vpow.pop %v1941
          %v1943 = vmul.f32 %v1914, 1.442695
          %v1944 = vpow.pop %v1943
          %v1945 = vmul.f32 %v1915, 1.442695
          %v1946 = vpow.pop %v1945
          %v1947 = vmul.f32 %v1916, 1.442695
          %v1948 = vpow.pop %v1947
          %v1949 = vsub.f32 %v1918, 1.0
          %v1950 = vsub.f32 %v1920, 1.0
          %v1951 = vsub.f32 %v1922, 1.0
          %v1952 = vsub.f32 %v1924, 1.0
          %v1953 = vsub.f32 %v1926, 1.0
          %v1954 = vsub.f32 %v1928, 1.0
          %v1955 = vsub.f32 %v1930, 1.0
          %v1956 = vsub.f32 %v1932, 1.0
          %v1957 = vsub.f32 %v1934, 1.0
          %v1958 = vsub.f32 %v1936, 1.0
          %v1959 = vsub.f32 %v1938, 1.0
          %v1960 = vsub.f32 %v1940, 1.0
          %v1961 = vsub.f32 %v1942, 1.0
          %v1962 = vsub.f32 %v1944, 1.0
          %v1963 = vsub.f32 %v1946, 1.0
          %v1964 = vsub.f32 %v1948, 1.0
          %v1965 = vsel %vm1885, %v1846, %v1949
          %v1966 = vsel %vm1886, %v1848, %v1950
          %v1967 = vsel %vm1887, %v1851, %v1951
          %v1968 = vsel %vm1888, %v1853, %v1952
          %v1969 = vsel %vm1889, %v1856, %v1953
          %v1970 = vsel %vm1890, %v1858, %v1954
          %v1971 = vsel %vm1891, %v1861, %v1955
          %v1972 = vsel %vm1892, %v1863, %v1956
          %v1973 = vsel %vm1893, %v1866, %v1957
          %v1974 = vsel %vm1894, %v1868, %v1958
          %v1975 = vsel %vm1895, %v1871, %v1959
          %v1976 = vsel %vm1896, %v1873, %v1960
          %v1977 = vsel %vm1897, %v1876, %v1961
          %v1978 = vsel %vm1898, %v1878, %v1962
          %v1979 = vsel %vm1899, %v1881, %v1963
          %v1980 = vsel %vm1900, %v1883, %v1964
          %v1981 = vpack.c.bf16 %v1965, %v1965
          %v1982 = vpack.c.bf16 %v1966, %v1966
          %v1983 = vpack.c.bf16 %v1967, %v1967
          %v1984 = vpack.c.bf16 %v1968, %v1968
          %v1985 = vpack.c.bf16 %v1969, %v1969
          %v1986 = vpack.c.bf16 %v1970, %v1970
          %v1987 = vpack.c.bf16 %v1971, %v1971
          %v1988 = vpack.c.bf16 %v1972, %v1972
          %v1989 = vpack.c.bf16 %v1973, %v1973
          %v1990 = vpack.c.bf16 %v1974, %v1974
          %v1991 = vpack.c.bf16 %v1975, %v1975
          %v1992 = vpack.c.bf16 %v1976, %v1976
          %v1993 = vpack.c.bf16 %v1977, %v1977
          %v1994 = vpack.c.bf16 %v1978, %v1978
          %v1995 = vpack.c.bf16 %v1979, %v1979
          %v1996 = vpack.c.bf16 %v1980, %v1980
          %s1997 = smul.addr %s1387, 4
          %s1998 = scalar_lea.vmem [#allocation3], %s1997
          %1999 = vst [vmem:[%s1998] sm:$0xf] %v1981
          %2000 = vst [vmem:[%s1998 + $0x4] sm:$0xf] %v1982
          %2001 = vst [vmem:[%s1998 + $0x8] sm:$0xf] %v1983
          %2002 = vst [vmem:[%s1998 + $0xc] sm:$0xf] %v1984
          %2003 = vst [vmem:[%s1998 + $0x10] sm:$0xf] %v1985
          %2004 = vst [vmem:[%s1998 + $0x14] sm:$0xf] %v1986
          %2005 = vst [vmem:[%s1998 + $0x18] sm:$0xf] %v1987
          %2006 = vst [vmem:[%s1998 + $0x1c] sm:$0xf] %v1988
          %2007 = vst [vmem:[%s1998 + $0x20] sm:$0xf] %v1989
          %2008 = vst [vmem:[%s1998 + $0x24] sm:$0xf] %v1990
          %2009 = vst [vmem:[%s1998 + $0x28] sm:$0xf] %v1991
          %2010 = vst [vmem:[%s1998 + $0x2c] sm:$0xf] %v1992
          %2011 = vst [vmem:[%s1998 + $0x30] sm:$0xf] %v1993
          %2012 = vst [vmem:[%s1998 + $0x34] sm:$0xf] %v1994
          %2013 = vst [vmem:[%s1998 + $0x38] sm:$0xf] %v1995
          %2014 = vst [vmem:[%s1998 + $0x3c] sm:$0xf] %v1996
          %p2015 = scmp.eq.s32.totalorder %s27, 2
          // Predicated region
          $region69: #{tpu_custom_call.1} parent=67 // pred_check
            %p2016 = pneg %p2015
          $region70: #{tpu_custom_call.1} parent=67 // pred_check_branch
            %2018 = sbr.rel (%p2016) target = $region72
          $region71: #{tpu_custom_call.1} parent=67 // pred_region
            %v2019 = vld [vmem:[#allocation11] sm:$0xf]
            %v2020 = vld [vmem:[#allocation11 + $0x4] sm:$0xf]
            %v2021 = vld [vmem:[#allocation11 + $0x8] sm:$0xf]
            %v2022 = vld [vmem:[#allocation11 + $0xc] sm:$0xf]
            %v2023 = vld [vmem:[#allocation11 + $0x10] sm:$0xf]
            %v2024 = vld [vmem:[#allocation11 + $0x14] sm:$0xf]
            %v2025 = vld [vmem:[#allocation11 + $0x18] sm:$0xf]
            %v2026 = vld [vmem:[#allocation11 + $0x1c] sm:$0xf]
            %v2027 = vld [vmem:[#allocation11 + $0x20] sm:$0xf]
            %v2028 = vld [vmem:[#allocation11 + $0x24] sm:$0xf]
            %v2029 = vld [vmem:[#allocation11 + $0x28] sm:$0xf]
            %v2030 = vld [vmem:[#allocation11 + $0x2c] sm:$0xf]
            %v2031 = vld [vmem:[#allocation11 + $0x30] sm:$0xf]
            %v2032 = vld [vmem:[#allocation11 + $0x34] sm:$0xf]
            %v2033 = vld [vmem:[#allocation11 + $0x38] sm:$0xf]
            %v2034 = vld [vmem:[#allocation11 + $0x3c] sm:$0xf]
            %v2035 = vld [vmem:[%s4] sm:$0x1]
            %v2037 = vperm.slane %v2035, 0
            %v2055 = vunpack.c.l.b16 %v1981
            %v2056 = vunpack.c.l.b16 %v1982
            %v2057 = vunpack.c.l.b16 %v1983
            %v2058 = vunpack.c.l.b16 %v1984
            %v2059 = vunpack.c.l.b16 %v1985
            %v2060 = vunpack.c.l.b16 %v1986
            %v2061 = vunpack.c.l.b16 %v1987
            %v2062 = vunpack.c.l.b16 %v1988
            %v2063 = vunpack.c.l.b16 %v1989
            %v2064 = vunpack.c.l.b16 %v1990
            %v2065 = vunpack.c.l.b16 %v1991
            %v2066 = vunpack.c.l.b16 %v1992
            %v2067 = vunpack.c.l.b16 %v1993
            %v2068 = vunpack.c.l.b16 %v1994
            %v2069 = vunpack.c.l.b16 %v1995
            %v2070 = vunpack.c.l.b16 %v1996
            %v2071 = vpack.c.b16 %v2056, %v2055
            %v2072 = vpack.c.b16 %v2058, %v2057
            %v2073 = vpack.c.b16 %v2060, %v2059
            %v2074 = vpack.c.b16 %v2062, %v2061
            %v2075 = vpack.c.b16 %v2064, %v2063
            %v2076 = vpack.c.b16 %v2066, %v2065
            %v2077 = vpack.c.b16 %v2068, %v2067
            %v2078 = vpack.c.b16 %v2070, %v2069
            %v2103 = vunpack.c.l.b16 %v2019
            %v2104 = vunpack.c.l.b16 %v2020
            %v2105 = vunpack.c.l.b16 %v2021
            %v2106 = vunpack.c.l.b16 %v2022
            %v2107 = vunpack.c.l.b16 %v2023
            %v2108 = vunpack.c.l.b16 %v2024
            %v2109 = vunpack.c.l.b16 %v2025
            %v2110 = vunpack.c.l.b16 %v2026
            %v2111 = vunpack.c.l.b16 %v2027
            %v2112 = vunpack.c.l.b16 %v2028
            %v2113 = vunpack.c.l.b16 %v2029
            %v2114 = vunpack.c.l.b16 %v2030
            %v2115 = vunpack.c.l.b16 %v2031
            %v2116 = vunpack.c.l.b16 %v2032
            %v2117 = vunpack.c.l.b16 %v2033
            %v2118 = vunpack.c.l.b16 %v2034
            %v2119 = vpack.c.b16 %v2104, %v2103
            %v2120 = vpack.c.b16 %v2106, %v2105
            %v2121 = vpack.c.b16 %v2108, %v2107
            %v2122 = vpack.c.b16 %v2110, %v2109
            %v2123 = vpack.c.b16 %v2112, %v2111
            %v2124 = vpack.c.b16 %v2114, %v2113
            %v2125 = vpack.c.b16 %v2116, %v2115
            %v2126 = vpack.c.b16 %v2118, %v2117
            %2135 = vmatpush.bf16.msra.mxu0 %v2126
            %2136 = vmatpush.bf16.msra.mxu0 %v2125
            %2137 = vmatpush.bf16.msra.mxu0 %v2124
            %2138 = vmatpush.bf16.msra.mxu0 %v2123
            %2139 = vmatpush.bf16.msra.mxu0 %v2122
            %2140 = vmatpush.bf16.msra.mxu0 %v2121
            %2141 = vmatpush.bf16.msra.mxu0 %v2120
            %2142 = vmatpush.bf16.msra.mxu0 %v2119
            %2143 = vmatmul.bf16.gmra.mxu0 %v2071
            %v2144 = vpop.f32.mrf.mxu0
            %v2145 = vadd.f32 %v2037, %v2144
            %v2146 = vpop.f32.mrf.mxu0
            %v2147 = vadd.f32 %v2037, %v2146
            %2148 = vmatmul.bf16.gmra.mxu0 %v2072
            %v2149 = vpop.f32.mrf.mxu0
            %v2150 = vadd.f32 %v2037, %v2149
            %v2151 = vpop.f32.mrf.mxu0
            %v2152 = vadd.f32 %v2037, %v2151
            %2153 = vmatmul.bf16.gmra.mxu0 %v2073
            %v2154 = vpop.f32.mrf.mxu0
            %v2155 = vadd.f32 %v2037, %v2154
            %v2156 = vpop.f32.mrf.mxu0
            %v2157 = vadd.f32 %v2037, %v2156
            %2158 = vmatmul.bf16.gmra.mxu0 %v2074
            %v2159 = vpop.f32.mrf.mxu0
            %v2160 = vadd.f32 %v2037, %v2159
            %v2161 = vpop.f32.mrf.mxu0
            %v2162 = vadd.f32 %v2037, %v2161
            %2163 = vmatmul.bf16.gmra.mxu0 %v2075
            %v2164 = vpop.f32.mrf.mxu0
            %v2165 = vadd.f32 %v2037, %v2164
            %v2166 = vpop.f32.mrf.mxu0
            %v2167 = vadd.f32 %v2037, %v2166
            %2168 = vmatmul.bf16.gmra.mxu0 %v2076
            %v2169 = vpop.f32.mrf.mxu0
            %v2170 = vadd.f32 %v2037, %v2169
            %v2171 = vpop.f32.mrf.mxu0
            %v2172 = vadd.f32 %v2037, %v2171
            %2173 = vmatmul.bf16.gmra.mxu0 %v2077
            %v2174 = vpop.f32.mrf.mxu0
            %v2175 = vadd.f32 %v2037, %v2174
            %v2176 = vpop.f32.mrf.mxu0
            %v2177 = vadd.f32 %v2037, %v2176
            %2178 = vmatmul.bf16.gmra.mxu0 %v2078
            %v2179 = vpop.f32.mrf.mxu0
            %v2180 = vadd.f32 %v2037, %v2179
            %v2181 = vpop.f32.mrf.mxu0
            %v2182 = vadd.f32 %v2037, %v2181
            %2183 = vdwg.mxu0
            %v2184 = vlaneseq
            %v2185 = vand.u32 %v2184, 127
            %vm2186 = vcmp.lt.s32.totalorder %v2185, 8
            %v2187 = vsel %vm2186, %v2145, -1e+30
            %v2188 = vsel %vm2186, %v2147, -1e+30
            %v2189 = vsel %vm2186, %v2150, -1e+30
            %v2190 = vsel %vm2186, %v2152, -1e+30
            %v2191 = vsel %vm2186, %v2155, -1e+30
            %v2192 = vsel %vm2186, %v2157, -1e+30
            %v2193 = vsel %vm2186, %v2160, -1e+30
            %v2194 = vsel %vm2186, %v2162, -1e+30
            %v2195 = vsel %vm2186, %v2165, -1e+30
            %v2196 = vsel %vm2186, %v2167, -1e+30
            %v2197 = vsel %vm2186, %v2170, -1e+30
            %v2198 = vsel %vm2186, %v2172, -1e+30
            %v2199 = vsel %vm2186, %v2175, -1e+30
            %v2200 = vsel %vm2186, %v2177, -1e+30
            %v2201 = vsel %vm2186, %v2180, -1e+30
            %v2202 = vsel %vm2186, %v2182, -1e+30
            %2203 = vmax.xlane.f32.xlu0 %v2187
            %v2204 = vpop.xlane.xlu0 %2203
            %2205 = vmax.xlane.f32.xlu0 %v2188
            %v2206 = vpop.xlane.xlu0 %2205
            %2207 = vmax.xlane.f32.xlu0 %v2189
            %v2208 = vpop.xlane.xlu0 %2207
            %2209 = vmax.xlane.f32.xlu0 %v2190
            %v2210 = vpop.xlane.xlu0 %2209
            %2211 = vmax.xlane.f32.xlu0 %v2191
            %v2212 = vpop.xlane.xlu0 %2211
            %2213 = vmax.xlane.f32.xlu0 %v2192
            %v2214 = vpop.xlane.xlu0 %2213
            %2215 = vmax.xlane.f32.xlu0 %v2193
            %v2216 = vpop.xlane.xlu0 %2215
            %2217 = vmax.xlane.f32.xlu0 %v2194
            %v2218 = vpop.xlane.xlu0 %2217
            %2219 = vmax.xlane.f32.xlu0 %v2195
            %v2220 = vpop.xlane.xlu0 %2219
            %2221 = vmax.xlane.f32.xlu0 %v2196
            %v2222 = vpop.xlane.xlu0 %2221
            %2223 = vmax.xlane.f32.xlu0 %v2197
            %v2224 = vpop.xlane.xlu0 %2223
            %2225 = vmax.xlane.f32.xlu0 %v2198
            %v2226 = vpop.xlane.xlu0 %2225
            %2227 = vmax.xlane.f32.xlu0 %v2199
            %v2228 = vpop.xlane.xlu0 %2227
            %2229 = vmax.xlane.f32.xlu0 %v2200
            %v2230 = vpop.xlane.xlu0 %2229
            %2231 = vmax.xlane.f32.xlu0 %v2201
            %v2232 = vpop.xlane.xlu0 %2231
            %2233 = vmax.xlane.f32.xlu0 %v2202
            %v2234 = vpop.xlane.xlu0 %2233
            %v2235 = vsub.f32 %v2187, %v2204
            %v2236 = vsub.f32 %v2188, %v2206
            %v2237 = vsub.f32 %v2189, %v2208
            %v2238 = vsub.f32 %v2190, %v2210
            %v2239 = vsub.f32 %v2191, %v2212
            %v2240 = vsub.f32 %v2192, %v2214
            %v2241 = vsub.f32 %v2193, %v2216
            %v2242 = vsub.f32 %v2194, %v2218
            %v2243 = vsub.f32 %v2195, %v2220
            %v2244 = vsub.f32 %v2196, %v2222
            %v2245 = vsub.f32 %v2197, %v2224
            %v2246 = vsub.f32 %v2198, %v2226
            %v2247 = vsub.f32 %v2199, %v2228
            %v2248 = vsub.f32 %v2200, %v2230
            %v2249 = vsub.f32 %v2201, %v2232
            %v2250 = vsub.f32 %v2202, %v2234
            %v2251 = vmul.f32 %v2235, 1.442695
            %v2252 = vpow.pop %v2251
            %v2253 = vmul.f32 %v2236, 1.442695
            %v2254 = vpow.pop %v2253
            %v2255 = vmul.f32 %v2237, 1.442695
            %v2256 = vpow.pop %v2255
            %v2257 = vmul.f32 %v2238, 1.442695
            %v2258 = vpow.pop %v2257
            %v2259 = vmul.f32 %v2239, 1.442695
            %v2260 = vpow.pop %v2259
            %v2261 = vmul.f32 %v2240, 1.442695
            %v2262 = vpow.pop %v2261
            %v2263 = vmul.f32 %v2241, 1.442695
            %v2264 = vpow.pop %v2263
            %v2265 = vmul.f32 %v2242, 1.442695
            %v2266 = vpow.pop %v2265
            %v2267 = vmul.f32 %v2243, 1.442695
            %v2268 = vpow.pop %v2267
            %v2269 = vmul.f32 %v2244, 1.442695
            %v2270 = vpow.pop %v2269
            %v2271 = vmul.f32 %v2245, 1.442695
            %v2272 = vpow.pop %v2271
            %v2273 = vmul.f32 %v2246, 1.442695
            %v2274 = vpow.pop %v2273
            %v2275 = vmul.f32 %v2247, 1.442695
            %v2276 = vpow.pop %v2275
            %v2277 = vmul.f32 %v2248, 1.442695
            %v2278 = vpow.pop %v2277
            %v2279 = vmul.f32 %v2249, 1.442695
            %v2280 = vpow.pop %v2279
            %v2281 = vmul.f32 %v2250, 1.442695
            %v2282 = vpow.pop %v2281
            %2283 = vadd.xlane.f32.xlu0 %v2252
            %v2284 = vpop.xlane.xlu0 %2283
            %2285 = vadd.xlane.f32.xlu0 %v2254
            %v2286 = vpop.xlane.xlu0 %2285
            %2287 = vadd.xlane.f32.xlu0 %v2256
            %v2288 = vpop.xlane.xlu0 %2287
            %2289 = vadd.xlane.f32.xlu0 %v2258
            %v2290 = vpop.xlane.xlu0 %2289
            %2291 = vadd.xlane.f32.xlu0 %v2260
            %v2292 = vpop.xlane.xlu0 %2291
            %2293 = vadd.xlane.f32.xlu0 %v2262
            %v2294 = vpop.xlane.xlu0 %2293
            %2295 = vadd.xlane.f32.xlu0 %v2264
            %v2296 = vpop.xlane.xlu0 %2295
            %2297 = vadd.xlane.f32.xlu0 %v2266
            %v2298 = vpop.xlane.xlu0 %2297
            %2299 = vadd.xlane.f32.xlu0 %v2268
            %v2300 = vpop.xlane.xlu0 %2299
            %2301 = vadd.xlane.f32.xlu0 %v2270
            %v2302 = vpop.xlane.xlu0 %2301
            %2303 = vadd.xlane.f32.xlu0 %v2272
            %v2304 = vpop.xlane.xlu0 %2303
            %2305 = vadd.xlane.f32.xlu0 %v2274
            %v2306 = vpop.xlane.xlu0 %2305
            %2307 = vadd.xlane.f32.xlu0 %v2276
            %v2308 = vpop.xlane.xlu0 %2307
            %2309 = vadd.xlane.f32.xlu0 %v2278
            %v2310 = vpop.xlane.xlu0 %2309
            %2311 = vadd.xlane.f32.xlu0 %v2280
            %v2312 = vpop.xlane.xlu0 %2311
            %2313 = vadd.xlane.f32.xlu0 %v2282
            %v2314 = vpop.xlane.xlu0 %2313
            %v2315 = vlog2.pop %v2284
            %v2316 = vmul.f32 %v2315, 0.6931472
            %v2317 = vlog2.pop %v2286
            %v2318 = vmul.f32 %v2317, 0.6931472
            %v2319 = vlog2.pop %v2288
            %v2320 = vmul.f32 %v2319, 0.6931472
            %v2321 = vlog2.pop %v2290
            %v2322 = vmul.f32 %v2321, 0.6931472
            %v2323 = vlog2.pop %v2292
            %v2324 = vmul.f32 %v2323, 0.6931472
            %v2325 = vlog2.pop %v2294
            %v2326 = vmul.f32 %v2325, 0.6931472
            %v2327 = vlog2.pop %v2296
            %v2328 = vmul.f32 %v2327, 0.6931472
            %v2329 = vlog2.pop %v2298
            %v2330 = vmul.f32 %v2329, 0.6931472
            %v2331 = vlog2.pop %v2300
            %v2332 = vmul.f32 %v2331, 0.6931472
            %v2333 = vlog2.pop %v2302
            %v2334 = vmul.f32 %v2333, 0.6931472
            %v2335 = vlog2.pop %v2304
            %v2336 = vmul.f32 %v2335, 0.6931472
            %v2337 = vlog2.pop %v2306
            %v2338 = vmul.f32 %v2337, 0.6931472
            %v2339 = vlog2.pop %v2308
            %v2340 = vmul.f32 %v2339, 0.6931472
            %v2341 = vlog2.pop %v2310
            %v2342 = vmul.f32 %v2341, 0.6931472
            %v2343 = vlog2.pop %v2312
            %v2344 = vmul.f32 %v2343, 0.6931472
            %v2345 = vlog2.pop %v2314
            %v2346 = vmul.f32 %v2345, 0.6931472
            %v2347 = vadd.f32 %v2204, %v2316
            %v2348 = vadd.f32 %v2206, %v2318
            %v2349 = vadd.f32 %v2208, %v2320
            %v2350 = vadd.f32 %v2210, %v2322
            %v2351 = vadd.f32 %v2212, %v2324
            %v2352 = vadd.f32 %v2214, %v2326
            %v2353 = vadd.f32 %v2216, %v2328
            %v2354 = vadd.f32 %v2218, %v2330
            %v2355 = vadd.f32 %v2220, %v2332
            %v2356 = vadd.f32 %v2222, %v2334
            %v2357 = vadd.f32 %v2224, %v2336
            %v2358 = vadd.f32 %v2226, %v2338
            %v2359 = vadd.f32 %v2228, %v2340
            %v2360 = vadd.f32 %v2230, %v2342
            %v2361 = vadd.f32 %v2232, %v2344
            %v2362 = vadd.f32 %v2234, %v2346
            %v2363 = vsub.f32 %v2187, %v2347
            %v2364 = vsub.f32 %v2188, %v2348
            %v2365 = vsub.f32 %v2189, %v2349
            %v2366 = vsub.f32 %v2190, %v2350
            %v2367 = vsub.f32 %v2191, %v2351
            %v2368 = vsub.f32 %v2192, %v2352
            %v2369 = vsub.f32 %v2193, %v2353
            %v2370 = vsub.f32 %v2194, %v2354
            %v2371 = vsub.f32 %v2195, %v2355
            %v2372 = vsub.f32 %v2196, %v2356
            %v2373 = vsub.f32 %v2197, %v2357
            %v2374 = vsub.f32 %v2198, %v2358
            %v2375 = vsub.f32 %v2199, %v2359
            %v2376 = vsub.f32 %v2200, %v2360
            %v2377 = vsub.f32 %v2201, %v2361
            %v2378 = vsub.f32 %v2202, %v2362
            %2379 = vst [vmem:[%s267] sm:$0xff] %v2363
            %2380 = vst [vmem:[%s267 + $0x8] sm:$0xff] %v2364
            %2381 = vst [vmem:[%s267 + $0x10] sm:$0xff] %v2365
            %2382 = vst [vmem:[%s267 + $0x18] sm:$0xff] %v2366
            %2383 = vst [vmem:[%s267 + $0x20] sm:$0xff] %v2367
            %2384 = vst [vmem:[%s267 + $0x28] sm:$0xff] %v2368
            %2385 = vst [vmem:[%s267 + $0x30] sm:$0xff] %v2369
            %2386 = vst [vmem:[%s267 + $0x38] sm:$0xff] %v2370
            %2387 = vst [vmem:[%s267 + $0x40] sm:$0xff] %v2371
            %2388 = vst [vmem:[%s267 + $0x48] sm:$0xff] %v2372
            %2389 = vst [vmem:[%s267 + $0x50] sm:$0xff] %v2373
            %2390 = vst [vmem:[%s267 + $0x58] sm:$0xff] %v2374
            %2391 = vst [vmem:[%s267 + $0x60] sm:$0xff] %v2375
            %2392 = vst [vmem:[%s267 + $0x68] sm:$0xff] %v2376
            %2393 = vst [vmem:[%s267 + $0x70] sm:$0xff] %v2377
            %2394 = vst [vmem:[%s267 + $0x78] sm:$0xff] %v2378
          $region72: #{tpu_custom_call.1} parent=67 // pred_fallthru
            _
        $region68: #{tpu_custom_call.1} parent=35 // pred_fallthru
          _
        %s2395 = sand.u32 %s136, 1
        %s2396 = scalar_lea.sflag [#allocation8], %s2395
        %s2397 = sand.u32 %s136, 1
        %s2398 = smul.addr %s2397, 128
        %s2399 = scalar_lea.vmem [#allocation12], %s2398
        // Predicated region
        $region73: #{tpu_custom_call.1} parent=35 // pred_check
          %p2400 = pneg %p146
        $region74: #{tpu_custom_call.1} parent=35 // pred_check_branch
          %2402 = sbr.rel (%p2400) target = $region76
        $region75: #{tpu_custom_call.1} parent=35 // pred_region
          %p2403 = scmp.eq.s32.totalorder %s27, 2
          %s2404 = scalar_select %p2403, %s28, 0
          %s2405 = smul.u32 16, %s2404
          %2407 = vsyncadd %s2396, 0
          %s2408 = smul.addr %s2405, 8
          %s2409 = scalar_lea.hbm %s5, %s2408
          %s2410 = sshll.u32 %s2399, 4
          %s2411 = int_to_ptr.vmem [resolvable:$true] %s2410
          %s2412 = sshll.u32 %s2409, 4
          %s2413 = int_to_ptr.hbm [resolvable:$true] %s2412
          %2418 = dma.vmem_to_hbm [thread:$0]  %s2411, 2048, %s2413, %s2396, 128, 128, 8
        $region76: #{tpu_custom_call.1} parent=35 // pred_fallthru
          _
      $region36: #{tpu_custom_call.1} parent=5 // pred_fallthru
        _
      %p2419 = scmp.le.s32.totalorder 2, %s18
      // Predicated region
      $region77: #{tpu_custom_call.1} parent=5 // pred_check
        %p2420 = pneg %p2419
      $region78: #{tpu_custom_call.1} parent=5 // pred_check_branch
        %2422 = sbr.rel (%p2420) target = $region80
      $region79: #{tpu_custom_call.1} parent=5 // pred_region
        %s2423 = ssub.s32 %s18, 2
        // Predicated region
        $region81: #{tpu_custom_call.1} parent=79 // pred_check
          %p2424 = pneg %p152
        $region82: #{tpu_custom_call.1} parent=79 // pred_check_branch
          %2426 = sbr.rel (%p2424) target = $region84
        $region83: #{tpu_custom_call.1} parent=79 // pred_region
          %s2427 = sand.u32 %s137, 1
          %s2428 = scalar_lea.sflag [#allocation8], %s2427
          %s2429 = sand.u32 %s137, 1
          %s2430 = smul.addr %s2429, 128
          %s2431 = scalar_lea.vmem [#allocation12], %s2430
          %2433 = dma.done %s2428, 2048
        $region84: #{tpu_custom_call.1} parent=79 // pred_fallthru
          _
      $region80: #{tpu_custom_call.1} parent=5 // pred_fallthru
        _
    $region6: #{tpu_custom_call.1} parent=1 // loop_footer
      %s22 = sadd.s32 1, %s18
    $region7: #{tpu_custom_call.1} parent=1 // loop_footer_branch
      %17 = sbr.rel target = $region3
    $region8: #{tpu_custom_call.1} parent=1 // loop_exit
      _
    %2434 = vsyncpa [#allocation7], 1
    %s2435 = scalar_lea.sflag [#allocation7], 1
    %2436 = vsyncpa %s2435, 1
    %2437 = vsyncpa [#allocation10], 1
    %s2438 = scalar_lea.sflag [#allocation10], 1
    %2439 = vsyncpa %s2438, 1
    %2440 = vsyncpa [#allocation8], 1
    %s2441 = scalar_lea.sflag [#allocation8], 1
    %2442 = vsyncpa %s2441, 1
  %2443 = vsyncmov [#allocation5]
  %s2444 = vpop.sfrf %2443
  %p2445 = scmp.eq.s32.totalorder %s2444, 0
  %p2446 = pneg %p2445
  %2448 = shalt.err (%p2446)

</llo_original>
